<compile_context>
chip_gen: v6e
topology: v6e:2x2x1
jax: 0.10.0
libtpu: 0.0.40
codegen_flags: <defaults>
</compile_context>

<pallas_src>
import jax
import jax.numpy as jnp
from jax import lax
from jax.experimental import pallas as pl
from jax.experimental.pallas import tpu as pltpu

# Lane-alignment pad.  128 suits all generations; on v6e/v7x (2x 256x256 MXU)
# a 256-multiple pad squeezes a bit more out of the systolic array.
LANE_PAD = 128


def _round_up(n, m):
    return ((n + m - 1) // m) * m


# ---------------------------------------------------------------------------
# Pallas kernel: whole batch in one grid step; conv-as-matmul + ReLU + Grams.
# ---------------------------------------------------------------------------
def basenet_gram_kernel(patches_ref, w_ref, b_ref, tex_ref, comp_ref):
    # patches_ref: (B, CKp, HW)   w_ref: (Coutp, CKp)   b_ref: (Coutp, 1)
    w = w_ref[...]
    bias = b_ref[...]                       # lane-broadcast, hoisted out of loop
    batch = patches_ref.shape[0]
    for b in range(batch):                  # B is tiny & static -> unrolled
        p = patches_ref[b]                  # (CKp, HW), lane axis = HW (dense)
        feat = jnp.dot(w, p, preferred_element_type=jnp.float32) + bias
        feat = jnp.maximum(feat, 0.0)       # (Coutp, HW)
        # TODO(synk): on v6e/v7x a bf16 cast of `feat` here would double MXU
        # throughput; kept f32 to stay tight against the reference tolerance.
        # texture Gram: x @ x^T == feat @ feat^T   (contract lane/HW axis)
        tex_ref[b] = lax.dot_general(
            feat, feat, (((1,), (1,)), ((), ())),
            preferred_element_type=jnp.float32)
        # composition Gram: x^T @ x == feat^T @ feat (contract channel axis)
        comp_ref[b] = lax.dot_general(
            feat, feat, (((0,), (0,)), ((), ())),
            preferred_element_type=jnp.float32)


# ---------------------------------------------------------------------------
# im2col in (B, CK, HW) layout (lane axis = HW).  Pure reshuffle, no compute.
# TODO(synk): for a real backbone channel count the 9x im2col HBM inflation
# should be replaced by shift-and-accumulate inside the kernel.
# ---------------------------------------------------------------------------
def im2col_chw(x, k=3, pad=1):
    B, C, H, W = x.shape
    xp = jnp.pad(x, ((0, 0), (0, 0), (pad, pad), (pad, pad)))
    cols = []
    for dh in range(k):
        for dw in range(k):
            cols.append(xp[:, :, dh:dh + H, dw:dw + W])       # (B, C, H, W)
    patches = jnp.stack(cols, axis=2)                          # (B, C, k*k, H, W)
    return patches.reshape(B, C * k * k, H * W)                # (B, CK, HW)


@jax.jit
def basenet_forward(x, conv_w, conv_b):
    """x: (B, Cin, H, W) NCHW.  conv_w: (Cout, Cin, 3, 3).  conv_b: (Cout,)."""
    B, Cin, H, W = x.shape
    Cout, _, K, _ = conv_w.shape
    HW = H * W
    CK = Cin * K * K
    CKp = _round_up(CK, LANE_PAD)
    Coutp = _round_up(Cout, LANE_PAD)
    # No zero-padding of HW: bias + ReLU at padded spatial positions would
    # contaminate the texture Gram.  HW = 256 is already lane-aligned.
    assert HW % LANE_PAD == 0, "HW must be a multiple of 128"

    patches = im2col_chw(x, k=K, pad=1).astype(jnp.float32)           # (B, CK, HW)
    patches = jnp.pad(patches, ((0, 0), (0, CKp - CK), (0, 0)))       # (B, CKp, HW)
    w_flat = conv_w.reshape(Cout, CK).astype(jnp.float32)
    w_flat = jnp.pad(w_flat, ((0, Coutp - Cout), (0, CKp - CK)))      # (Coutp, CKp)
    b_flat = jnp.pad(conv_b.astype(jnp.float32), (0, Coutp - Cout))
    b_flat = b_flat.reshape(Coutp, 1)                                 # (Coutp, 1)

    flops = B * (2 * Coutp * CKp * HW          # conv matmul
                 + 2 * Coutp * Coutp * HW      # texture Gram
                 + 2 * HW * HW * Coutp)        # composition Gram
    bytes_accessed = 4 * (B * CKp * HW + Coutp * CKp + Coutp
                          + B * Coutp * Coutp + B * HW * HW)

    tex_p, comp = pl.pallas_call(
        basenet_gram_kernel,
        out_shape=(
            jax.ShapeDtypeStruct((B, Coutp, Coutp), jnp.float32),
            jax.ShapeDtypeStruct((B, HW, HW), jnp.float32),
        ),
        in_specs=[
            pl.BlockSpec((B, CKp, HW), lambda: (0, 0, 0)),
            pl.BlockSpec((Coutp, CKp), lambda: (0, 0)),
            pl.BlockSpec((Coutp, 1), lambda: (0, 0)),
        ],
        out_specs=(
            pl.BlockSpec((B, Coutp, Coutp), lambda: (0, 0, 0)),
            pl.BlockSpec((B, HW, HW), lambda: (0, 0, 0)),
        ),
        cost_estimate=pl.CostEstimate(
            flops=flops, transcendentals=0, bytes_accessed=bytes_accessed),
        compiler_params=pltpu.CompilerParams(
            vmem_limit_bytes=32 * 1024 * 1024),
    )(patches, w_flat, b_flat)

    tex = tex_p[:, :Cout, :Cout]   # drop exact-zero padded channels (free slice)
    return tex, comp


# ---------------------------------------------------------------------------
# Pure-JAX reference (same semantics as the PyTorch forward with the stand-in
# backbone) for a correctness check.
# ---------------------------------------------------------------------------
def basenet_forward_ref(x, conv_w, conv_b):
    feat = lax.conv_general_dilated(
        x, conv_w, window_strides=(1, 1), padding="SAME",
        dimension_numbers=("NCHW", "OIHW", "NCHW"))
    feat = jax.nn.relu(feat + conv_b.reshape(1, -1, 1, 1))       # (B, Cout, H, W)
    B, Cout = feat.shape[0], feat.shape[1]
    xf = feat.reshape(B, Cout, -1)                               # (B, Cout, HW)
    tex = jnp.matmul(xf, xf.transpose(0, 2, 1))                  # (B, Cout, Cout)
    comp = jnp.matmul(xf.transpose(0, 2, 1), xf)                 # (B, HW, HW)
    return tex, comp


if __name__ == "__main__":
    # Small, deterministic shapes: batch=2, Cin=3 (image), 16x16 spatial, Cout=8.
    B, Cin, H, W, Cout, K = 2, 3, 16, 16, 8, 3

    key = jax.random.PRNGKey(0)
    kx, kw, kb = jax.random.split(key, 3)
    x = jax.random.normal(kx, (B, Cin, H, W), dtype=jnp.float32)
    # TODO(synk): pretrained IMAGENET1K_V1 backbone weights are not loadable
    # here; the stand-in conv weights below are synthetic but deterministic.
    conv_w = 0.1 * jax.random.normal(kw, (Cout, Cin, K, K), dtype=jnp.float32)
    conv_b = 0.01 * jax.random.normal(kb, (Cout,), dtype=jnp.float32)

    tex, comp = basenet_forward(x, conv_w, conv_b)
    jax.block_until_ready((tex, comp))

    tex_ref, comp_ref = basenet_forward_ref(x, conv_w, conv_b)
    assert tex.shape == (B, Cout, Cout) and comp.shape == (B, H * W, H * W)
    assert jnp.allclose(tex, tex_ref, rtol=1e-5, atol=1e-3)
    assert jnp.allclose(comp, comp_ref, rtol=1e-5, atol=1e-3)

    print("KERNEL_OK")
</pallas_src>

<mosaic_0001>
module attributes {stable_mosaic.version = 11 : i64} {
  func.func @basenet_gram_kernel(%arg0: memref<2x128x256xf32, #tpu.memory_space<vmem>>, %arg1: memref<128x128xf32, #tpu.memory_space<vmem>>, %arg2: memref<128x1xf32, #tpu.memory_space<vmem>>, %arg3: memref<2x128x128xf32, #tpu.memory_space<vmem>>, %arg4: memref<2x256x256xf32, #tpu.memory_space<vmem>>) attributes {dimension_semantics = [], scalar_prefetch = 0 : i64, scratch_operands = 0 : i64, tpu.core_type = #tpu.core_type<tc>} {
    %c0 = arith.constant 0 : index
    %c0_0 = arith.constant 0 : index
    %0 = vector.load %arg1[%c0, %c0_0] : memref<128x128xf32, #tpu.memory_space<vmem>>, vector<128x128xf32>
    %c0_1 = arith.constant 0 : index
    %c0_2 = arith.constant 0 : index
    %1 = vector.load %arg2[%c0_1, %c0_2] : memref<128x1xf32, #tpu.memory_space<vmem>>, vector<128x1xf32>
    %c0_3 = arith.constant 0 : index
    %c0_4 = arith.constant 0 : index
    %c0_5 = arith.constant 0 : index
    %2 = vector.load %arg0[%c0_3, %c0_4, %c0_5] : memref<2x128x256xf32, #tpu.memory_space<vmem>>, vector<1x128x256xf32>
    %3 = vector.shape_cast %2 : vector<1x128x256xf32> to vector<128x256xf32>
    %cst = arith.constant dense<0.000000e+00> : vector<128x256xf32>
    %4 = tpu.matmul %0, %3, %cst {dimension_numbers = #tpu.dot_dimension_numbers<[1], [0], [0], [1], [0, 0, 1, 1], [], []>} : vector<128x128xf32>, vector<128x256xf32>, vector<128x256xf32> -> vector<128x256xf32>
    %5 = vector.broadcast %1 : vector<128x1xf32> to vector<128x256xf32>
    %6 = arith.addf %4, %5 : vector<128x256xf32>
    %cst_6 = arith.constant 0.000000e+00 : f32
    %7 = vector.broadcast %cst_6 : f32 to vector<128x256xf32>
    %8 = arith.maximumf %6, %7 : vector<128x256xf32>
    %cst_7 = arith.constant dense<0.000000e+00> : vector<128x128xf32>
    %9 = tpu.matmul %8, %8, %cst_7 {dimension_numbers = #tpu.dot_dimension_numbers<[1], [1], [0], [0], [0, 0, 1, 0], [], []>} : vector<128x256xf32>, vector<128x256xf32>, vector<128x128xf32> -> vector<128x128xf32>
    %c0_8 = arith.constant 0 : index
    %c0_9 = arith.constant 0 : index
    %c0_10 = arith.constant 0 : index
    %10 = vector.load %arg3[%c0_8, %c0_9, %c0_10] : memref<2x128x128xf32, #tpu.memory_space<vmem>>, vector<1x128x128xf32>
    %11 = vector.shape_cast %10 : vector<1x128x128xf32> to vector<128x128xf32>
    %12 = vector.shape_cast %9 : vector<128x128xf32> to vector<1x128x128xf32>
    tpu.vector_store %arg3[%c0_8, %c0_9, %c0_10], %12 {strides = array<i32>} : memref<2x128x128xf32, #tpu.memory_space<vmem>>, vector<1x128x128xf32>,
    %cst_11 = arith.constant dense<0.000000e+00> : vector<256x256xf32>
    %13 = tpu.matmul %8, %8, %cst_11 {dimension_numbers = #tpu.dot_dimension_numbers<[0], [0], [1], [1], [0, 1, 1, 1], [], []>} : vector<128x256xf32>, vector<128x256xf32>, vector<256x256xf32> -> vector<256x256xf32>
    %c0_12 = arith.constant 0 : index
    %c0_13 = arith.constant 0 : index
    %c0_14 = arith.constant 0 : index
    %14 = vector.load %arg4[%c0_12, %c0_13, %c0_14] : memref<2x256x256xf32, #tpu.memory_space<vmem>>, vector<1x256x256xf32>
    %15 = vector.shape_cast %14 : vector<1x256x256xf32> to vector<256x256xf32>
    %16 = vector.shape_cast %13 : vector<256x256xf32> to vector<1x256x256xf32>
    tpu.vector_store %arg4[%c0_12, %c0_13, %c0_14], %16 {strides = array<i32>} : memref<2x256x256xf32, #tpu.memory_space<vmem>>, vector<1x256x256xf32>,
    %c1 = arith.constant 1 : index
    %c0_15 = arith.constant 0 : index
    %c0_16 = arith.constant 0 : index
    %17 = vector.load %arg0[%c1, %c0_15, %c0_16] : memref<2x128x256xf32, #tpu.memory_space<vmem>>, vector<1x128x256xf32>
    %18 = vector.shape_cast %17 : vector<1x128x256xf32> to vector<128x256xf32>
    %cst_17 = arith.constant dense<0.000000e+00> : vector<128x256xf32>
    %19 = tpu.matmul %0, %18, %cst_17 {dimension_numbers = #tpu.dot_dimension_numbers<[1], [0], [0], [1], [0, 0, 1, 1], [], []>} : vector<128x128xf32>, vector<128x256xf32>, vector<128x256xf32> -> vector<128x256xf32>
    %20 = vector.broadcast %1 : vector<128x1xf32> to vector<128x256xf32>
    %21 = arith.addf %19, %20 : vector<128x256xf32>
    %cst_18 = arith.constant 0.000000e+00 : f32
    %22 = vector.broadcast %cst_18 : f32 to vector<128x256xf32>
    %23 = arith.maximumf %21, %22 : vector<128x256xf32>
    %cst_19 = arith.constant dense<0.000000e+00> : vector<128x128xf32>
    %24 = tpu.matmul %23, %23, %cst_19 {dimension_numbers = #tpu.dot_dimension_numbers<[1], [1], [0], [0], [0, 0, 1, 0], [], []>} : vector<128x256xf32>, vector<128x256xf32>, vector<128x128xf32> -> vector<128x128xf32>
    %c1_20 = arith.constant 1 : index
    %c0_21 = arith.constant 0 : index
    %c0_22 = arith.constant 0 : index
    %25 = vector.load %arg3[%c1_20, %c0_21, %c0_22] : memref<2x128x128xf32, #tpu.memory_space<vmem>>, vector<1x128x128xf32>
    %26 = vector.shape_cast %25 : vector<1x128x128xf32> to vector<128x128xf32>
    %27 = vector.shape_cast %24 : vector<128x128xf32> to vector<1x128x128xf32>
    tpu.vector_store %arg3[%c1_20, %c0_21, %c0_22], %27 {strides = array<i32>} : memref<2x128x128xf32, #tpu.memory_space<vmem>>, vector<1x128x128xf32>,
    %cst_23 = arith.constant dense<0.000000e+00> : vector<256x256xf32>
    %28 = tpu.matmul %23, %23, %cst_23 {dimension_numbers = #tpu.dot_dimension_numbers<[0], [0], [1], [1], [0, 1, 1, 1], [], []>} : vector<128x256xf32>, vector<128x256xf32>, vector<256x256xf32> -> vector<256x256xf32>
    %c1_24 = arith.constant 1 : index
    %c0_25 = arith.constant 0 : index
    %c0_26 = arith.constant 0 : index
    %29 = vector.load %arg4[%c1_24, %c0_25, %c0_26] : memref<2x256x256xf32, #tpu.memory_space<vmem>>, vector<1x256x256xf32>
    %30 = vector.shape_cast %29 : vector<1x256x256xf32> to vector<256x256xf32>
    %31 = vector.shape_cast %28 : vector<256x256xf32> to vector<1x256x256xf32>
    tpu.vector_store %arg4[%c1_24, %c0_25, %c0_26], %31 {strides = array<i32>} : memref<2x256x256xf32, #tpu.memory_space<vmem>>, vector<1x256x256xf32>,
    return
  }
}

</mosaic_0001>

<llo_original>
// kernel: basenet_forward.1
$region0: #{basenet_forward.1}
  #allocation0 [shape = 'u32[]', space=smem, size = 0x4, offset = 0x4, fixed_abs, tag = 'smem constant byte address 0x4 - core index']
  #allocation1 [shape = 'u32[144,128]{1,0:T(1,128)}', space=vmem, size = 0x12000, scoped, tag = 'internal scratch']
  %s0 = inlined_call_operand.vmem [shape: f32[2,128,256], index: 0, kind: input, shape index: {}]
  %s1 = inlined_call_operand.vmem [shape: f32[128,128], index: 1, kind: input, shape index: {}]
  %s2 = inlined_call_operand.vmem [shape: f32[128,1], index: 2, kind: input, shape index: {}]
  %s3 = inlined_call_operand.vmem [shape: f32[2,128,128], index: 3, kind: output, shape index: {0}]
  %s4 = inlined_call_operand.hbm [shape: f32[2,256,256], index: 4, kind: output, shape index: {1}]
  %5 = xla_tuple %s3, %s4
  %s6 = sld [smem:[#allocation0]]
  $region30: #{basenet_forward.1} parent=0
    _
  %s8 = ssub.s32 1, %s6
  %s9 = scalar_select 0, %s8, %s6
  $region1: #{basenet_forward.1} parent=0
    #allocation2 [shape = 'u8[524288]{0}', space=vmem, size = 0x80000, scoped, tag = 'output window, operand 1, single buffered']
    #allocation3 [shape = 's32[1]{0}', space=sflag, size = 0x4, scoped, tag = 'scoped memory for basenet_forward.1']
    %10 = vsyncpa [#allocation3], 0
    // Predicated region
    $region2: #{basenet_forward.1} parent=1 // pred_check
      _
    $region3: #{basenet_forward.1} parent=1 // pred_check_branch
      %12 = sbr.rel (0) target = $region5
    $region4: #{basenet_forward.1} parent=1 // pred_region
      _
    $region5: #{basenet_forward.1} parent=1 // pred_fallthru
      _
    // Predicated region
    $region6: #{basenet_forward.1} parent=1 // pred_check
      _
    $region7: #{basenet_forward.1} parent=1 // pred_check_branch
      %14 = sbr.rel (0) target = $region9
    $region8: #{basenet_forward.1} parent=1 // pred_region
      _
    $region9: #{basenet_forward.1} parent=1 // pred_fallthru
      _
    // Predicated region
    $region10: #{basenet_forward.1} parent=1 // pred_check
      _
    $region11: #{basenet_forward.1} parent=1 // pred_check_branch
      %16 = sbr.rel (0) target = $region13
    $region12: #{basenet_forward.1} parent=1 // pred_region
      _
    $region13: #{basenet_forward.1} parent=1 // pred_fallthru
      _
    %v17 = vld [vmem:[%s1] sm:$0xff]
    %v18 = vld [vmem:[%s1 + $0x8] sm:$0xff]
    %v19 = vld [vmem:[%s1 + $0x10] sm:$0xff]
    %v20 = vld [vmem:[%s1 + $0x18] sm:$0xff]
    %v21 = vld [vmem:[%s1 + $0x20] sm:$0xff]
    %v22 = vld [vmem:[%s1 + $0x28] sm:$0xff]
    %v23 = vld [vmem:[%s1 + $0x30] sm:$0xff]
    %v24 = vld [vmem:[%s1 + $0x38] sm:$0xff]
    %v25 = vld [vmem:[%s1 + $0x40] sm:$0xff]
    %v26 = vld [vmem:[%s1 + $0x48] sm:$0xff]
    %v27 = vld [vmem:[%s1 + $0x50] sm:$0xff]
    %v28 = vld [vmem:[%s1 + $0x58] sm:$0xff]
    %v29 = vld [vmem:[%s1 + $0x60] sm:$0xff]
    %v30 = vld [vmem:[%s1 + $0x68] sm:$0xff]
    %v31 = vld [vmem:[%s1 + $0x70] sm:$0xff]
    %v32 = vld [vmem:[%s1 + $0x78] sm:$0xff]
    %v33 = vld [vmem:[%s2] sm:$0xff]
    %v34 = vld [vmem:[%s2 + $0x8] sm:$0xff]
    %v35 = vld [vmem:[%s2 + $0x10] sm:$0xff]
    %v36 = vld [vmem:[%s2 + $0x18] sm:$0xff]
    %v37 = vld [vmem:[%s2 + $0x20] sm:$0xff]
    %v38 = vld [vmem:[%s2 + $0x28] sm:$0xff]
    %v39 = vld [vmem:[%s2 + $0x30] sm:$0xff]
    %v40 = vld [vmem:[%s2 + $0x38] sm:$0xff]
    %v41 = vld [vmem:[%s2 + $0x40] sm:$0xff]
    %v42 = vld [vmem:[%s2 + $0x48] sm:$0xff]
    %v43 = vld [vmem:[%s2 + $0x50] sm:$0xff]
    %v44 = vld [vmem:[%s2 + $0x58] sm:$0xff]
    %v45 = vld [vmem:[%s2 + $0x60] sm:$0xff]
    %v46 = vld [vmem:[%s2 + $0x68] sm:$0xff]
    %v47 = vld [vmem:[%s2 + $0x70] sm:$0xff]
    %v48 = vld [vmem:[%s2 + $0x78] sm:$0xff]
    %v49 = vld [vmem:[%s0] sm:$0xff]
    %v50 = vld [vmem:[%s0 + $0x8] sm:$0xff]
    %v51 = vld [vmem:[%s0 + $0x10] sm:$0xff]
    %v52 = vld [vmem:[%s0 + $0x18] sm:$0xff]
    %v53 = vld [vmem:[%s0 + $0x20] sm:$0xff]
    %v54 = vld [vmem:[%s0 + $0x28] sm:$0xff]
    %v55 = vld [vmem:[%s0 + $0x30] sm:$0xff]
    %v56 = vld [vmem:[%s0 + $0x38] sm:$0xff]
    %v57 = vld [vmem:[%s0 + $0x40] sm:$0xff]
    %v58 = vld [vmem:[%s0 + $0x48] sm:$0xff]
    %v59 = vld [vmem:[%s0 + $0x50] sm:$0xff]
    %v60 = vld [vmem:[%s0 + $0x58] sm:$0xff]
    %v61 = vld [vmem:[%s0 + $0x60] sm:$0xff]
    %v62 = vld [vmem:[%s0 + $0x68] sm:$0xff]
    %v63 = vld [vmem:[%s0 + $0x70] sm:$0xff]
    %v64 = vld [vmem:[%s0 + $0x78] sm:$0xff]
    %v65 = vld [vmem:[%s0 + $0x80] sm:$0xff]
    %v66 = vld [vmem:[%s0 + $0x88] sm:$0xff]
    %v67 = vld [vmem:[%s0 + $0x90] sm:$0xff]
    %v68 = vld [vmem:[%s0 + $0x98] sm:$0xff]
    %v69 = vld [vmem:[%s0 + $0xa0] sm:$0xff]
    %v70 = vld [vmem:[%s0 + $0xa8] sm:$0xff]
    %v71 = vld [vmem:[%s0 + $0xb0] sm:$0xff]
    %v72 = vld [vmem:[%s0 + $0xb8] sm:$0xff]
    %v73 = vld [vmem:[%s0 + $0xc0] sm:$0xff]
    %v74 = vld [vmem:[%s0 + $0xc8] sm:$0xff]
    %v75 = vld [vmem:[%s0 + $0xd0] sm:$0xff]
    %v76 = vld [vmem:[%s0 + $0xd8] sm:$0xff]
    %v77 = vld [vmem:[%s0 + $0xe0] sm:$0xff]
    %v78 = vld [vmem:[%s0 + $0xe8] sm:$0xff]
    %v79 = vld [vmem:[%s0 + $0xf0] sm:$0xff]
    %v80 = vld [vmem:[%s0 + $0xf8] sm:$0xff]
    %82 = vset.pattern.permute.xlu0 0
    %83 = vperm.xlu0 %82, %v33
    %v84 = vpop.permute.xlu0 %83
    %87 = vset.pattern.permute.xlu0 0
    %88 = vperm.xlu0 %87, %v34
    %v89 = vpop.permute.xlu0 %88
    %92 = vset.pattern.permute.xlu0 0
    %93 = vperm.xlu0 %92, %v35
    %v94 = vpop.permute.xlu0 %93
    %97 = vset.pattern.permute.xlu0 0
    %98 = vperm.xlu0 %97, %v36
    %v99 = vpop.permute.xlu0 %98
    %102 = vset.pattern.permute.xlu0 0
    %103 = vperm.xlu0 %102, %v37
    %v104 = vpop.permute.xlu0 %103
    %107 = vset.pattern.permute.xlu0 0
    %108 = vperm.xlu0 %107, %v38
    %v109 = vpop.permute.xlu0 %108
    %112 = vset.pattern.permute.xlu0 0
    %113 = vperm.xlu0 %112, %v39
    %v114 = vpop.permute.xlu0 %113
    %117 = vset.pattern.permute.xlu0 0
    %118 = vperm.xlu0 %117, %v40
    %v119 = vpop.permute.xlu0 %118
    %122 = vset.pattern.permute.xlu0 0
    %123 = vperm.xlu0 %122, %v41
    %v124 = vpop.permute.xlu0 %123
    %127 = vset.pattern.permute.xlu0 0
    %128 = vperm.xlu0 %127, %v42
    %v129 = vpop.permute.xlu0 %128
    %132 = vset.pattern.permute.xlu0 0
    %133 = vperm.xlu0 %132, %v43
    %v134 = vpop.permute.xlu0 %133
    %137 = vset.pattern.permute.xlu0 0
    %138 = vperm.xlu0 %137, %v44
    %v139 = vpop.permute.xlu0 %138
    %142 = vset.pattern.permute.xlu0 0
    %143 = vperm.xlu0 %142, %v45
    %v144 = vpop.permute.xlu0 %143
    %147 = vset.pattern.permute.xlu0 0
    %148 = vperm.xlu0 %147, %v46
    %v149 = vpop.permute.xlu0 %148
    %152 = vset.pattern.permute.xlu0 0
    %153 = vperm.xlu0 %152, %v47
    %v154 = vpop.permute.xlu0 %153
    %157 = vset.pattern.permute.xlu0 0
    %158 = vperm.xlu0 %157, %v48
    %v159 = vpop.permute.xlu0 %158
    %161 = vmatprep.subr.mxu0 %v80
    %162 = vmatpush1.msra.mxu0 %v79
    %163 = vmatprep.subr.mxu0 %v78
    %164 = vmatpush1.msra.mxu0 %v77
    %165 = vmatprep.subr.mxu0 %v76
    %166 = vmatpush1.msra.mxu0 %v75
    %167 = vmatprep.subr.mxu0 %v74
    %168 = vmatpush1.msra.mxu0 %v73
    %169 = vmatprep.subr.mxu0 %v72
    %170 = vmatpush1.msra.mxu0 %v71
    %171 = vmatprep.subr.mxu0 %v70
    %172 = vmatpush1.msra.mxu0 %v69
    %173 = vmatprep.subr.mxu0 %v68
    %174 = vmatpush1.msra.mxu0 %v67
    %175 = vmatprep.subr.mxu0 %v66
    %176 = vmatpush1.msra.mxu0 %v65
    %177 = vmatprep.subr.mxu0 %v64
    %178 = vmatpush1.msra.mxu0 %v63
    %179 = vmatprep.subr.mxu0 %v62
    %180 = vmatpush1.msra.mxu0 %v61
    %181 = vmatprep.subr.mxu0 %v60
    %182 = vmatpush1.msra.mxu0 %v59
    %183 = vmatprep.subr.mxu0 %v58
    %184 = vmatpush1.msra.mxu0 %v57
    %185 = vmatprep.subr.mxu0 %v56
    %186 = vmatpush1.msra.mxu0 %v55
    %187 = vmatprep.subr.mxu0 %v54
    %188 = vmatpush1.msra.mxu0 %v53
    %189 = vmatprep.subr.mxu0 %v52
    %190 = vmatpush1.msra.mxu0 %v51
    %191 = vmatprep.subr.mxu0 %v50
    %192 = vmatpush1.msra.mxu0 %v49
    %193 = vmatprep.subr.mxu0 0.0
    %194 = vmatpush2.msra.mxu0 0.0
    %195 = vmatprep.subr.mxu0 0.0
    %196 = vmatpush2.msra.mxu0 0.0
    %197 = vmatprep.subr.mxu0 0.0
    %198 = vmatpush2.msra.mxu0 0.0
    %199 = vmatprep.subr.mxu0 0.0
    %200 = vmatpush2.msra.mxu0 0.0
    %201 = vmatprep.subr.mxu0 0.0
    %202 = vmatpush2.msra.mxu0 0.0
    %203 = vmatprep.subr.mxu0 0.0
    %204 = vmatpush2.msra.mxu0 0.0
    %205 = vmatprep.subr.mxu0 0.0
    %206 = vmatpush2.msra.mxu0 0.0
    %207 = vmatprep.subr.mxu0 0.0
    %208 = vmatpush2.msra.mxu0 0.0
    %209 = vmatprep.subr.mxu0 0.0
    %210 = vmatpush2.msra.mxu0 0.0
    %211 = vmatprep.subr.mxu0 0.0
    %212 = vmatpush2.msra.mxu0 0.0
    %213 = vmatprep.subr.mxu0 0.0
    %214 = vmatpush2.msra.mxu0 0.0
    %215 = vmatprep.subr.mxu0 0.0
    %216 = vmatpush2.msra.mxu0 0.0
    %217 = vmatprep.subr.mxu0 0.0
    %218 = vmatpush2.msra.mxu0 0.0
    %219 = vmatprep.subr.mxu0 0.0
    %220 = vmatpush2.msra.mxu0 0.0
    %221 = vmatprep.subr.mxu0 0.0
    %222 = vmatpush2.msra.mxu0 0.0
    %223 = vmatprep.subr.mxu0 0.0
    %224 = vmatpush2.msra.mxu0 0.0
    %225 = vmatprep.mubr.f32.mxu0 0.0
    %226 = vmatmul.mubr.f32.gmra.mxu0 %v17
    %v227 = vpop.f32.mrf.mxu0
    %v228 = vadd.f32 %v84, %v227
    %v229 = vpop.f32.mrf.mxu0
    %v230 = vadd.f32 %v84, %v229
    %231 = vmatprep.mubr.f32.mxu0 0.0
    %232 = vmatmul.mubr.f32.gmra.mxu0 %v18
    %v233 = vpop.f32.mrf.mxu0
    %v234 = vadd.f32 %v89, %v233
    %v235 = vpop.f32.mrf.mxu0
    %v236 = vadd.f32 %v89, %v235
    %237 = vmatprep.mubr.f32.mxu0 0.0
    %238 = vmatmul.mubr.f32.gmra.mxu0 %v19
    %v239 = vpop.f32.mrf.mxu0
    %v240 = vadd.f32 %v94, %v239
    %v241 = vpop.f32.mrf.mxu0
    %v242 = vadd.f32 %v94, %v241
    %243 = vmatprep.mubr.f32.mxu0 0.0
    %244 = vmatmul.mubr.f32.gmra.mxu0 %v20
    %v245 = vpop.f32.mrf.mxu0
    %v246 = vadd.f32 %v99, %v245
    %v247 = vpop.f32.mrf.mxu0
    %v248 = vadd.f32 %v99, %v247
    %249 = vmatprep.mubr.f32.mxu0 0.0
    %250 = vmatmul.mubr.f32.gmra.mxu0 %v21
    %v251 = vpop.f32.mrf.mxu0
    %v252 = vadd.f32 %v104, %v251
    %v253 = vpop.f32.mrf.mxu0
    %v254 = vadd.f32 %v104, %v253
    %255 = vmatprep.mubr.f32.mxu0 0.0
    %256 = vmatmul.mubr.f32.gmra.mxu0 %v22
    %v257 = vpop.f32.mrf.mxu0
    %v258 = vadd.f32 %v109, %v257
    %v259 = vpop.f32.mrf.mxu0
    %v260 = vadd.f32 %v109, %v259
    %261 = vmatprep.mubr.f32.mxu0 0.0
    %262 = vmatmul.mubr.f32.gmra.mxu0 %v23
    %v263 = vpop.f32.mrf.mxu0
    %v264 = vadd.f32 %v114, %v263
    %v265 = vpop.f32.mrf.mxu0
    %v266 = vadd.f32 %v114, %v265
    %267 = vmatprep.mubr.f32.mxu0 0.0
    %268 = vmatmul.mubr.f32.gmra.mxu0 %v24
    %v269 = vpop.f32.mrf.mxu0
    %v270 = vadd.f32 %v119, %v269
    %v271 = vpop.f32.mrf.mxu0
    %v272 = vadd.f32 %v119, %v271
    %273 = vmatprep.mubr.f32.mxu0 0.0
    %274 = vmatmul.mubr.f32.gmra.mxu0 %v25
    %v275 = vpop.f32.mrf.mxu0
    %v276 = vadd.f32 %v124, %v275
    %v277 = vpop.f32.mrf.mxu0
    %v278 = vadd.f32 %v124, %v277
    %279 = vmatprep.mubr.f32.mxu0 0.0
    %280 = vmatmul.mubr.f32.gmra.mxu0 %v26
    %v281 = vpop.f32.mrf.mxu0
    %v282 = vadd.f32 %v129, %v281
    %v283 = vpop.f32.mrf.mxu0
    %v284 = vadd.f32 %v129, %v283
    %285 = vmatprep.mubr.f32.mxu0 0.0
    %286 = vmatmul.mubr.f32.gmra.mxu0 %v27
    %v287 = vpop.f32.mrf.mxu0
    %v288 = vadd.f32 %v134, %v287
    %v289 = vpop.f32.mrf.mxu0
    %v290 = vadd.f32 %v134, %v289
    %291 = vmatprep.mubr.f32.mxu0 0.0
    %292 = vmatmul.mubr.f32.gmra.mxu0 %v28
    %v293 = vpop.f32.mrf.mxu0
    %v294 = vadd.f32 %v139, %v293
    %v295 = vpop.f32.mrf.mxu0
    %v296 = vadd.f32 %v139, %v295
    %297 = vmatprep.mubr.f32.mxu0 0.0
    %298 = vmatmul.mubr.f32.gmra.mxu0 %v29
    %v299 = vpop.f32.mrf.mxu0
    %v300 = vadd.f32 %v144, %v299
    %v301 = vpop.f32.mrf.mxu0
    %v302 = vadd.f32 %v144, %v301
    %303 = vmatprep.mubr.f32.mxu0 0.0
    %304 = vmatmul.mubr.f32.gmra.mxu0 %v30
    %v305 = vpop.f32.mrf.mxu0
    %v306 = vadd.f32 %v149, %v305
    %v307 = vpop.f32.mrf.mxu0
    %v308 = vadd.f32 %v149, %v307
    %309 = vmatprep.mubr.f32.mxu0 0.0
    %310 = vmatmul.mubr.f32.gmra.mxu0 %v31
    %v311 = vpop.f32.mrf.mxu0
    %v312 = vadd.f32 %v154, %v311
    %v313 = vpop.f32.mrf.mxu0
    %v314 = vadd.f32 %v154, %v313
    %315 = vmatprep.mubr.f32.mxu0 0.0
    %316 = vmatmul.mubr.f32.gmra.mxu0 %v32
    %v317 = vpop.f32.mrf.mxu0
    %v318 = vadd.f32 %v159, %v317
    %v319 = vpop.f32.mrf.mxu0
    %v320 = vadd.f32 %v159, %v319
    %321 = vdwg.mxu0
    %v322 = vmax.f32 %v228, 0.0
    %v323 = vmax.f32 %v230, 0.0
    %v324 = vmax.f32 %v234, 0.0
    %v325 = vmax.f32 %v236, 0.0
    %v326 = vmax.f32 %v240, 0.0
    %v327 = vmax.f32 %v242, 0.0
    %v328 = vmax.f32 %v246, 0.0
    %v329 = vmax.f32 %v248, 0.0
    %v330 = vmax.f32 %v252, 0.0
    %v331 = vmax.f32 %v254, 0.0
    %v332 = vmax.f32 %v258, 0.0
    %v333 = vmax.f32 %v260, 0.0
    %v334 = vmax.f32 %v264, 0.0
    %v335 = vmax.f32 %v266, 0.0
    %v336 = vmax.f32 %v270, 0.0
    %v337 = vmax.f32 %v272, 0.0
    %v338 = vmax.f32 %v276, 0.0
    %v339 = vmax.f32 %v278, 0.0
    %v340 = vmax.f32 %v282, 0.0
    %v341 = vmax.f32 %v284, 0.0
    %v342 = vmax.f32 %v288, 0.0
    %v343 = vmax.f32 %v290, 0.0
    %v344 = vmax.f32 %v294, 0.0
    %v345 = vmax.f32 %v296, 0.0
    %v346 = vmax.f32 %v300, 0.0
    %v347 = vmax.f32 %v302, 0.0
    %v348 = vmax.f32 %v306, 0.0
    %v349 = vmax.f32 %v308, 0.0
    %v350 = vmax.f32 %v312, 0.0
    %v351 = vmax.f32 %v314, 0.0
    %v352 = vmax.f32 %v318, 0.0
    %v353 = vmax.f32 %v320, 0.0
    %354 = vmatprep.subr.mxu0 %v353
    %355 = vmatpush1.xpose.msra.mxu0 %v352
    %356 = vmatprep.subr.mxu0 %v351
    %357 = vmatpush1.xpose.msra.mxu0 %v350
    %358 = vmatprep.subr.mxu0 %v349
    %359 = vmatpush1.xpose.msra.mxu0 %v348
    %360 = vmatprep.subr.mxu0 %v347
    %361 = vmatpush1.xpose.msra.mxu0 %v346
    %362 = vmatprep.subr.mxu0 %v345
    %363 = vmatpush1.xpose.msra.mxu0 %v344
    %364 = vmatprep.subr.mxu0 %v343
    %365 = vmatpush1.xpose.msra.mxu0 %v342
    %366 = vmatprep.subr.mxu0 %v341
    %367 = vmatpush1.xpose.msra.mxu0 %v340
    %368 = vmatprep.subr.mxu0 %v339
    %369 = vmatpush1.xpose.msra.mxu0 %v338
    %370 = vmatprep.subr.mxu0 %v337
    %371 = vmatpush1.xpose.msra.mxu0 %v336
    %372 = vmatprep.subr.mxu0 %v335
    %373 = vmatpush1.xpose.msra.mxu0 %v334
    %374 = vmatprep.subr.mxu0 %v333
    %375 = vmatpush1.xpose.msra.mxu0 %v332
    %376 = vmatprep.subr.mxu0 %v331
    %377 = vmatpush1.xpose.msra.mxu0 %v330
    %378 = vmatprep.subr.mxu0 %v329
    %379 = vmatpush1.xpose.msra.mxu0 %v328
    %380 = vmatprep.subr.mxu0 %v327
    %381 = vmatpush1.xpose.msra.mxu0 %v326
    %382 = vmatprep.subr.mxu0 %v325
    %383 = vmatpush1.xpose.msra.mxu0 %v324
    %384 = vmatprep.subr.mxu0 %v323
    %385 = vmatpush1.xpose.msra.mxu0 %v322
    %386 = vmatprep.subr.mxu0 0.0
    %387 = vmatpush2.xpose.msra.mxu0 0.0
    %388 = vmatprep.subr.mxu0 0.0
    %389 = vmatpush2.xpose.msra.mxu0 0.0
    %390 = vmatprep.subr.mxu0 0.0
    %391 = vmatpush2.xpose.msra.mxu0 0.0
    %392 = vmatprep.subr.mxu0 0.0
    %393 = vmatpush2.xpose.msra.mxu0 0.0
    %394 = vmatprep.subr.mxu0 0.0
    %395 = vmatpush2.xpose.msra.mxu0 0.0
    %396 = vmatprep.subr.mxu0 0.0
    %397 = vmatpush2.xpose.msra.mxu0 0.0
    %398 = vmatprep.subr.mxu0 0.0
    %399 = vmatpush2.xpose.msra.mxu0 0.0
    %400 = vmatprep.subr.mxu0 0.0
    %401 = vmatpush2.xpose.msra.mxu0 0.0
    %402 = vmatprep.subr.mxu0 0.0
    %403 = vmatpush2.xpose.msra.mxu0 0.0
    %404 = vmatprep.subr.mxu0 0.0
    %405 = vmatpush2.xpose.msra.mxu0 0.0
    %406 = vmatprep.subr.mxu0 0.0
    %407 = vmatpush2.xpose.msra.mxu0 0.0
    %408 = vmatprep.subr.mxu0 0.0
    %409 = vmatpush2.xpose.msra.mxu0 0.0
    %410 = vmatprep.subr.mxu0 0.0
    %411 = vmatpush2.xpose.msra.mxu0 0.0
    %412 = vmatprep.subr.mxu0 0.0
    %413 = vmatpush2.xpose.msra.mxu0 0.0
    %414 = vmatprep.subr.mxu0 0.0
    %415 = vmatpush2.xpose.msra.mxu0 0.0
    %416 = vmatprep.subr.mxu0 0.0
    %417 = vmatpush2.xpose.msra.mxu0 0.0
    %418 = vmatprep.mubr.f32.mxu0 %v323
    %419 = vmatmul.mubr.f32.gmra.mxu0 %v322
    %v420 = vpop.f32.mrf.mxu0
    %v421 = vadd.f32 0.0, %v420
    %v422 = vpop.f32.mrf.mxu0
    %423 = vmatprep.mubr.f32.mxu0 %v325
    %424 = vmatmul.mubr.f32.gmra.mxu0 %v324
    %v425 = vpop.f32.mrf.mxu0
    %v426 = vadd.f32 0.0, %v425
    %v427 = vpop.f32.mrf.mxu0
    %428 = vmatprep.mubr.f32.mxu0 %v327
    %429 = vmatmul.mubr.f32.gmra.mxu0 %v326
    %v430 = vpop.f32.mrf.mxu0
    %v431 = vadd.f32 0.0, %v430
    %v432 = vpop.f32.mrf.mxu0
    %433 = vmatprep.mubr.f32.mxu0 %v329
    %434 = vmatmul.mubr.f32.gmra.mxu0 %v328
    %v435 = vpop.f32.mrf.mxu0
    %v436 = vadd.f32 0.0, %v435
    %v437 = vpop.f32.mrf.mxu0
    %438 = vmatprep.mubr.f32.mxu0 %v331
    %439 = vmatmul.mubr.f32.gmra.mxu0 %v330
    %v440 = vpop.f32.mrf.mxu0
    %v441 = vadd.f32 0.0, %v440
    %v442 = vpop.f32.mrf.mxu0
    %443 = vmatprep.mubr.f32.mxu0 %v333
    %444 = vmatmul.mubr.f32.gmra.mxu0 %v332
    %v445 = vpop.f32.mrf.mxu0
    %v446 = vadd.f32 0.0, %v445
    %v447 = vpop.f32.mrf.mxu0
    %448 = vmatprep.mubr.f32.mxu0 %v335
    %449 = vmatmul.mubr.f32.gmra.mxu0 %v334
    %v450 = vpop.f32.mrf.mxu0
    %v451 = vadd.f32 0.0, %v450
    %v452 = vpop.f32.mrf.mxu0
    %453 = vmatprep.mubr.f32.mxu0 %v337
    %454 = vmatmul.mubr.f32.gmra.mxu0 %v336
    %v455 = vpop.f32.mrf.mxu0
    %v456 = vadd.f32 0.0, %v455
    %v457 = vpop.f32.mrf.mxu0
    %458 = vmatprep.mubr.f32.mxu0 %v339
    %459 = vmatmul.mubr.f32.gmra.mxu0 %v338
    %v460 = vpop.f32.mrf.mxu0
    %v461 = vadd.f32 0.0, %v460
    %v462 = vpop.f32.mrf.mxu0
    %463 = vmatprep.mubr.f32.mxu0 %v341
    %464 = vmatmul.mubr.f32.gmra.mxu0 %v340
    %v465 = vpop.f32.mrf.mxu0
    %v466 = vadd.f32 0.0, %v465
    %v467 = vpop.f32.mrf.mxu0
    %468 = vmatprep.mubr.f32.mxu0 %v343
    %469 = vmatmul.mubr.f32.gmra.mxu0 %v342
    %v470 = vpop.f32.mrf.mxu0
    %v471 = vadd.f32 0.0, %v470
    %v472 = vpop.f32.mrf.mxu0
    %473 = vmatprep.mubr.f32.mxu0 %v345
    %474 = vmatmul.mubr.f32.gmra.mxu0 %v344
    %v475 = vpop.f32.mrf.mxu0
    %v476 = vadd.f32 0.0, %v475
    %v477 = vpop.f32.mrf.mxu0
    %478 = vmatprep.mubr.f32.mxu0 %v347
    %479 = vmatmul.mubr.f32.gmra.mxu0 %v346
    %v480 = vpop.f32.mrf.mxu0
    %v481 = vadd.f32 0.0, %v480
    %v482 = vpop.f32.mrf.mxu0
    %483 = vmatprep.mubr.f32.mxu0 %v349
    %484 = vmatmul.mubr.f32.gmra.mxu0 %v348
    %v485 = vpop.f32.mrf.mxu0
    %v486 = vadd.f32 0.0, %v485
    %v487 = vpop.f32.mrf.mxu0
    %488 = vmatprep.mubr.f32.mxu0 %v351
    %489 = vmatmul.mubr.f32.gmra.mxu0 %v350
    %v490 = vpop.f32.mrf.mxu0
    %v491 = vadd.f32 0.0, %v490
    %v492 = vpop.f32.mrf.mxu0
    %493 = vmatprep.mubr.f32.mxu0 %v353
    %494 = vmatmul.mubr.f32.gmra.mxu0 %v352
    %v495 = vpop.f32.mrf.mxu0
    %v496 = vadd.f32 0.0, %v495
    %v497 = vpop.f32.mrf.mxu0
    %498 = vdwg.mxu0
    %499 = vst [vmem:[%s3] sm:$0xff] %v421
    %500 = vst [vmem:[%s3 + $0x8] sm:$0xff] %v426
    %501 = vst [vmem:[%s3 + $0x10] sm:$0xff] %v431
    %502 = vst [vmem:[%s3 + $0x18] sm:$0xff] %v436
    %503 = vst [vmem:[%s3 + $0x20] sm:$0xff] %v441
    %504 = vst [vmem:[%s3 + $0x28] sm:$0xff] %v446
    %505 = vst [vmem:[%s3 + $0x30] sm:$0xff] %v451
    %506 = vst [vmem:[%s3 + $0x38] sm:$0xff] %v456
    %507 = vst [vmem:[%s3 + $0x40] sm:$0xff] %v461
    %508 = vst [vmem:[%s3 + $0x48] sm:$0xff] %v466
    %509 = vst [vmem:[%s3 + $0x50] sm:$0xff] %v471
    %510 = vst [vmem:[%s3 + $0x58] sm:$0xff] %v476
    %511 = vst [vmem:[%s3 + $0x60] sm:$0xff] %v481
    %512 = vst [vmem:[%s3 + $0x68] sm:$0xff] %v486
    %513 = vst [vmem:[%s3 + $0x70] sm:$0xff] %v491
    %514 = vst [vmem:[%s3 + $0x78] sm:$0xff] %v496
    %515 = vxpose.xlu0.b32.start [1/16] %v322, 128
    %516 = vxpose.xlu0.b32.cont [2/16] %v324, 128
    %517 = vxpose.xlu0.b32.cont [3/16] %v326, 128
    %518 = vxpose.xlu0.b32.cont [4/16] %v328, 128
    %519 = vxpose.xlu0.b32.cont [5/16] %v330, 128
    %520 = vxpose.xlu0.b32.cont [6/16] %v332, 128
    %521 = vxpose.xlu0.b32.cont [7/16] %v334, 128
    %522 = vxpose.xlu0.b32.cont [8/16] %v336, 128
    %523 = vxpose.xlu0.b32.cont [9/16] %v338, 128
    %524 = vxpose.xlu0.b32.cont [10/16] %v340, 128
    %525 = vxpose.xlu0.b32.cont [11/16] %v342, 128
    %526 = vxpose.xlu0.b32.cont [12/16] %v344, 128
    %527 = vxpose.xlu0.b32.cont [13/16] %v346, 128
    %528 = vxpose.xlu0.b32.cont [14/16] %v348, 128
    %529 = vxpose.xlu0.b32.cont [15/16] %v350, 128
    %530 = vxpose.xlu0.b32.end [16/16] %v352, 128
    %v531 = vpop.trf.xlu0
    %v532 = vpop.trf.xlu0
    %v533 = vpop.trf.xlu0
    %v534 = vpop.trf.xlu0
    %v535 = vpop.trf.xlu0
    %v536 = vpop.trf.xlu0
    %v537 = vpop.trf.xlu0
    %v538 = vpop.trf.xlu0
    %v539 = vpop.trf.xlu0
    %v540 = vpop.trf.xlu0
    %v541 = vpop.trf.xlu0
    %v542 = vpop.trf.xlu0
    %v543 = vpop.trf.xlu0
    %v544 = vpop.trf.xlu0
    %v545 = vpop.trf.xlu0
    %v546 = vpop.trf.xlu0
    %547 = vxpose.xlu0.b32.start [1/16] %v323, 128
    %548 = vxpose.xlu0.b32.cont [2/16] %v325, 128
    %549 = vxpose.xlu0.b32.cont [3/16] %v327, 128
    %550 = vxpose.xlu0.b32.cont [4/16] %v329, 128
    %551 = vxpose.xlu0.b32.cont [5/16] %v331, 128
    %552 = vxpose.xlu0.b32.cont [6/16] %v333, 128
    %553 = vxpose.xlu0.b32.cont [7/16] %v335, 128
    %554 = vxpose.xlu0.b32.cont [8/16] %v337, 128
    %555 = vxpose.xlu0.b32.cont [9/16] %v339, 128
    %556 = vxpose.xlu0.b32.cont [10/16] %v341, 128
    %557 = vxpose.xlu0.b32.cont [11/16] %v343, 128
    %558 = vxpose.xlu0.b32.cont [12/16] %v345, 128
    %559 = vxpose.xlu0.b32.cont [13/16] %v347, 128
    %560 = vxpose.xlu0.b32.cont [14/16] %v349, 128
    %561 = vxpose.xlu0.b32.cont [15/16] %v351, 128
    %562 = vxpose.xlu0.b32.end [16/16] %v353, 128
    %v563 = vpop.trf.xlu0
    %v564 = vpop.trf.xlu0
    %v565 = vpop.trf.xlu0
    %v566 = vpop.trf.xlu0
    %v567 = vpop.trf.xlu0
    %v568 = vpop.trf.xlu0
    %v569 = vpop.trf.xlu0
    %v570 = vpop.trf.xlu0
    %v571 = vpop.trf.xlu0
    %v572 = vpop.trf.xlu0
    %v573 = vpop.trf.xlu0
    %v574 = vpop.trf.xlu0
    %v575 = vpop.trf.xlu0
    %v576 = vpop.trf.xlu0
    %v577 = vpop.trf.xlu0
    %v578 = vpop.trf.xlu0
    %579 = vmatprep.subr.mxu0 %v353
    %580 = vmatpush1.msra.mxu0 %v352
    %581 = vmatprep.subr.mxu0 %v351
    %582 = vmatpush1.msra.mxu0 %v350
    %583 = vmatprep.subr.mxu0 %v349
    %584 = vmatpush1.msra.mxu0 %v348
    %585 = vmatprep.subr.mxu0 %v347
    %586 = vmatpush1.msra.mxu0 %v346
    %587 = vmatprep.subr.mxu0 %v345
    %588 = vmatpush1.msra.mxu0 %v344
    %589 = vmatprep.subr.mxu0 %v343
    %590 = vmatpush1.msra.mxu0 %v342
    %591 = vmatprep.subr.mxu0 %v341
    %592 = vmatpush1.msra.mxu0 %v340
    %593 = vmatprep.subr.mxu0 %v339
    %594 = vmatpush1.msra.mxu0 %v338
    %595 = vmatprep.subr.mxu0 %v337
    %596 = vmatpush1.msra.mxu0 %v336
    %597 = vmatprep.subr.mxu0 %v335
    %598 = vmatpush1.msra.mxu0 %v334
    %599 = vmatprep.subr.mxu0 %v333
    %600 = vmatpush1.msra.mxu0 %v332
    %601 = vmatprep.subr.mxu0 %v331
    %602 = vmatpush1.msra.mxu0 %v330
    %603 = vmatprep.subr.mxu0 %v329
    %604 = vmatpush1.msra.mxu0 %v328
    %605 = vmatprep.subr.mxu0 %v327
    %606 = vmatpush1.msra.mxu0 %v326
    %607 = vmatprep.subr.mxu0 %v325
    %608 = vmatpush1.msra.mxu0 %v324
    %609 = vmatprep.subr.mxu0 %v323
    %610 = vmatpush1.msra.mxu0 %v322
    %611 = vmatprep.subr.mxu0 0.0
    %612 = vmatpush2.msra.mxu0 0.0
    %613 = vmatprep.subr.mxu0 0.0
    %614 = vmatpush2.msra.mxu0 0.0
    %615 = vmatprep.subr.mxu0 0.0
    %616 = vmatpush2.msra.mxu0 0.0
    %617 = vmatprep.subr.mxu0 0.0
    %618 = vmatpush2.msra.mxu0 0.0
    %619 = vmatprep.subr.mxu0 0.0
    %620 = vmatpush2.msra.mxu0 0.0
    %621 = vmatprep.subr.mxu0 0.0
    %622 = vmatpush2.msra.mxu0 0.0
    %623 = vmatprep.subr.mxu0 0.0
    %624 = vmatpush2.msra.mxu0 0.0
    %625 = vmatprep.subr.mxu0 0.0
    %626 = vmatpush2.msra.mxu0 0.0
    %627 = vmatprep.subr.mxu0 0.0
    %628 = vmatpush2.msra.mxu0 0.0
    %629 = vmatprep.subr.mxu0 0.0
    %630 = vmatpush2.msra.mxu0 0.0
    %631 = vmatprep.subr.mxu0 0.0
    %632 = vmatpush2.msra.mxu0 0.0
    %633 = vmatprep.subr.mxu0 0.0
    %634 = vmatpush2.msra.mxu0 0.0
    %635 = vmatprep.subr.mxu0 0.0
    %636 = vmatpush2.msra.mxu0 0.0
    %637 = vmatprep.subr.mxu0 0.0
    %638 = vmatpush2.msra.mxu0 0.0
    %639 = vmatprep.subr.mxu0 0.0
    %640 = vmatpush2.msra.mxu0 0.0
    %641 = vmatprep.subr.mxu0 0.0
    %642 = vmatpush2.msra.mxu0 0.0
    %643 = vmatprep.mubr.f32.mxu0 0.0
    %644 = vmatmul.mubr.f32.gmra.mxu0 %v531
    %v645 = vpop.f32.mrf.mxu0
    %v646 = vadd.f32 0.0, %v645
    %v647 = vpop.f32.mrf.mxu0
    %v648 = vadd.f32 0.0, %v647
    %649 = vmatprep.mubr.f32.mxu0 0.0
    %650 = vmatmul.mubr.f32.gmra.mxu0 %v532
    %v651 = vpop.f32.mrf.mxu0
    %v652 = vadd.f32 0.0, %v651
    %v653 = vpop.f32.mrf.mxu0
    %v654 = vadd.f32 0.0, %v653
    %655 = vmatprep.mubr.f32.mxu0 0.0
    %656 = vmatmul.mubr.f32.gmra.mxu0 %v533
    %v657 = vpop.f32.mrf.mxu0
    %v658 = vadd.f32 0.0, %v657
    %v659 = vpop.f32.mrf.mxu0
    %v660 = vadd.f32 0.0, %v659
    %661 = vmatprep.mubr.f32.mxu0 0.0
    %662 = vmatmul.mubr.f32.gmra.mxu0 %v534
    %v663 = vpop.f32.mrf.mxu0
    %v664 = vadd.f32 0.0, %v663
    %v665 = vpop.f32.mrf.mxu0
    %v666 = vadd.f32 0.0, %v665
    %667 = vmatprep.mubr.f32.mxu0 0.0
    %668 = vmatmul.mubr.f32.gmra.mxu0 %v535
    %v669 = vpop.f32.mrf.mxu0
    %v670 = vadd.f32 0.0, %v669
    %v671 = vpop.f32.mrf.mxu0
    %v672 = vadd.f32 0.0, %v671
    %673 = vmatprep.mubr.f32.mxu0 0.0
    %674 = vmatmul.mubr.f32.gmra.mxu0 %v536
    %v675 = vpop.f32.mrf.mxu0
    %v676 = vadd.f32 0.0, %v675
    %v677 = vpop.f32.mrf.mxu0
    %v678 = vadd.f32 0.0, %v677
    %679 = vmatprep.mubr.f32.mxu0 0.0
    %680 = vmatmul.mubr.f32.gmra.mxu0 %v537
    %v681 = vpop.f32.mrf.mxu0
    %v682 = vadd.f32 0.0, %v681
    %v683 = vpop.f32.mrf.mxu0
    %v684 = vadd.f32 0.0, %v683
    %685 = vmatprep.mubr.f32.mxu0 0.0
    %686 = vmatmul.mubr.f32.gmra.mxu0 %v538
    %v687 = vpop.f32.mrf.mxu0
    %v688 = vadd.f32 0.0, %v687
    %v689 = vpop.f32.mrf.mxu0
    %v690 = vadd.f32 0.0, %v689
    %691 = vmatprep.mubr.f32.mxu0 0.0
    %692 = vmatmul.mubr.f32.gmra.mxu0 %v539
    %v693 = vpop.f32.mrf.mxu0
    %v694 = vadd.f32 0.0, %v693
    %v695 = vpop.f32.mrf.mxu0
    %v696 = vadd.f32 0.0, %v695
    %697 = vmatprep.mubr.f32.mxu0 0.0
    %698 = vmatmul.mubr.f32.gmra.mxu0 %v540
    %v699 = vpop.f32.mrf.mxu0
    %v700 = vadd.f32 0.0, %v699
    %v701 = vpop.f32.mrf.mxu0
    %v702 = vadd.f32 0.0, %v701
    %703 = vmatprep.mubr.f32.mxu0 0.0
    %704 = vmatmul.mubr.f32.gmra.mxu0 %v541
    %v705 = vpop.f32.mrf.mxu0
    %v706 = vadd.f32 0.0, %v705
    %v707 = vpop.f32.mrf.mxu0
    %v708 = vadd.f32 0.0, %v707
    %709 = vmatprep.mubr.f32.mxu0 0.0
    %710 = vmatmul.mubr.f32.gmra.mxu0 %v542
    %v711 = vpop.f32.mrf.mxu0
    %v712 = vadd.f32 0.0, %v711
    %v713 = vpop.f32.mrf.mxu0
    %v714 = vadd.f32 0.0, %v713
    %715 = vmatprep.mubr.f32.mxu0 0.0
    %716 = vmatmul.mubr.f32.gmra.mxu0 %v543
    %v717 = vpop.f32.mrf.mxu0
    %v718 = vadd.f32 0.0, %v717
    %v719 = vpop.f32.mrf.mxu0
    %v720 = vadd.f32 0.0, %v719
    %721 = vmatprep.mubr.f32.mxu0 0.0
    %722 = vmatmul.mubr.f32.gmra.mxu0 %v544
    %v723 = vpop.f32.mrf.mxu0
    %v724 = vadd.f32 0.0, %v723
    %v725 = vpop.f32.mrf.mxu0
    %v726 = vadd.f32 0.0, %v725
    %727 = vmatprep.mubr.f32.mxu0 0.0
    %728 = vmatmul.mubr.f32.gmra.mxu0 %v545
    %v729 = vpop.f32.mrf.mxu0
    %v730 = vadd.f32 0.0, %v729
    %v731 = vpop.f32.mrf.mxu0
    %v732 = vadd.f32 0.0, %v731
    %733 = vmatprep.mubr.f32.mxu0 0.0
    %734 = vmatmul.mubr.f32.gmra.mxu0 %v546
    %v735 = vpop.f32.mrf.mxu0
    %v736 = vadd.f32 0.0, %v735
    %v737 = vpop.f32.mrf.mxu0
    %v738 = vadd.f32 0.0, %v737
    %739 = vmatprep.mubr.f32.mxu0 0.0
    %740 = vmatmul.mubr.f32.gmra.mxu0 %v563
    %v741 = vpop.f32.mrf.mxu0
    %v742 = vadd.f32 0.0, %v741
    %v743 = vpop.f32.mrf.mxu0
    %v744 = vadd.f32 0.0, %v743
    %745 = vmatprep.mubr.f32.mxu0 0.0
    %746 = vmatmul.mubr.f32.gmra.mxu0 %v564
    %v747 = vpop.f32.mrf.mxu0
    %v748 = vadd.f32 0.0, %v747
    %v749 = vpop.f32.mrf.mxu0
    %v750 = vadd.f32 0.0, %v749
    %751 = vmatprep.mubr.f32.mxu0 0.0
    %752 = vmatmul.mubr.f32.gmra.mxu0 %v565
    %v753 = vpop.f32.mrf.mxu0
    %v754 = vadd.f32 0.0, %v753
    %v755 = vpop.f32.mrf.mxu0
    %v756 = vadd.f32 0.0, %v755
    %757 = vmatprep.mubr.f32.mxu0 0.0
    %758 = vmatmul.mubr.f32.gmra.mxu0 %v566
    %v759 = vpop.f32.mrf.mxu0
    %v760 = vadd.f32 0.0, %v759
    %v761 = vpop.f32.mrf.mxu0
    %v762 = vadd.f32 0.0, %v761
    %763 = vmatprep.mubr.f32.mxu0 0.0
    %764 = vmatmul.mubr.f32.gmra.mxu0 %v567
    %v765 = vpop.f32.mrf.mxu0
    %v766 = vadd.f32 0.0, %v765
    %v767 = vpop.f32.mrf.mxu0
    %v768 = vadd.f32 0.0, %v767
    %769 = vmatprep.mubr.f32.mxu0 0.0
    %770 = vmatmul.mubr.f32.gmra.mxu0 %v568
    %v771 = vpop.f32.mrf.mxu0
    %v772 = vadd.f32 0.0, %v771
    %v773 = vpop.f32.mrf.mxu0
    %v774 = vadd.f32 0.0, %v773
    %775 = vmatprep.mubr.f32.mxu0 0.0
    %776 = vmatmul.mubr.f32.gmra.mxu0 %v569
    %v777 = vpop.f32.mrf.mxu0
    %v778 = vadd.f32 0.0, %v777
    %v779 = vpop.f32.mrf.mxu0
    %v780 = vadd.f32 0.0, %v779
    %781 = vmatprep.mubr.f32.mxu0 0.0
    %782 = vmatmul.mubr.f32.gmra.mxu0 %v570
    %v783 = vpop.f32.mrf.mxu0
    %v784 = vadd.f32 0.0, %v783
    %v785 = vpop.f32.mrf.mxu0
    %v786 = vadd.f32 0.0, %v785
    %787 = vmatprep.mubr.f32.mxu0 0.0
    %788 = vmatmul.mubr.f32.gmra.mxu0 %v571
    %v789 = vpop.f32.mrf.mxu0
    %v790 = vadd.f32 0.0, %v789
    %v791 = vpop.f32.mrf.mxu0
    %v792 = vadd.f32 0.0, %v791
    %793 = vmatprep.mubr.f32.mxu0 0.0
    %794 = vmatmul.mubr.f32.gmra.mxu0 %v572
    %v795 = vpop.f32.mrf.mxu0
    %v796 = vadd.f32 0.0, %v795
    %v797 = vpop.f32.mrf.mxu0
    %v798 = vadd.f32 0.0, %v797
    %799 = vmatprep.mubr.f32.mxu0 0.0
    %800 = vmatmul.mubr.f32.gmra.mxu0 %v573
    %v801 = vpop.f32.mrf.mxu0
    %v802 = vadd.f32 0.0, %v801
    %v803 = vpop.f32.mrf.mxu0
    %v804 = vadd.f32 0.0, %v803
    %805 = vmatprep.mubr.f32.mxu0 0.0
    %806 = vmatmul.mubr.f32.gmra.mxu0 %v574
    %v807 = vpop.f32.mrf.mxu0
    %v808 = vadd.f32 0.0, %v807
    %v809 = vpop.f32.mrf.mxu0
    %v810 = vadd.f32 0.0, %v809
    %811 = vmatprep.mubr.f32.mxu0 0.0
    %812 = vmatmul.mubr.f32.gmra.mxu0 %v575
    %v813 = vpop.f32.mrf.mxu0
    %v814 = vadd.f32 0.0, %v813
    %v815 = vpop.f32.mrf.mxu0
    %v816 = vadd.f32 0.0, %v815
    %817 = vmatprep.mubr.f32.mxu0 0.0
    %818 = vmatmul.mubr.f32.gmra.mxu0 %v576
    %v819 = vpop.f32.mrf.mxu0
    %v820 = vadd.f32 0.0, %v819
    %v821 = vpop.f32.mrf.mxu0
    %v822 = vadd.f32 0.0, %v821
    %823 = vmatprep.mubr.f32.mxu0 0.0
    %824 = vmatmul.mubr.f32.gmra.mxu0 %v577
    %v825 = vpop.f32.mrf.mxu0
    %v826 = vadd.f32 0.0, %v825
    %v827 = vpop.f32.mrf.mxu0
    %v828 = vadd.f32 0.0, %v827
    %829 = vmatprep.mubr.f32.mxu0 0.0
    %830 = vmatmul.mubr.f32.gmra.mxu0 %v578
    %v831 = vpop.f32.mrf.mxu0
    %v832 = vadd.f32 0.0, %v831
    %v833 = vpop.f32.mrf.mxu0
    %v834 = vadd.f32 0.0, %v833
    %835 = vdwg.mxu0
    %836 = vst [vmem:[#allocation2] sm:$0xff] %v646
    %837 = vst [vmem:[#allocation2 + $0x8] sm:$0xff] %v648
    %838 = vst [vmem:[#allocation2 + $0x10] sm:$0xff] %v652
    %839 = vst [vmem:[#allocation2 + $0x18] sm:$0xff] %v654
    %840 = vst [vmem:[#allocation2 + $0x20] sm:$0xff] %v658
    %841 = vst [vmem:[#allocation2 + $0x28] sm:$0xff] %v660
    %842 = vst [vmem:[#allocation2 + $0x30] sm:$0xff] %v664
    %843 = vst [vmem:[#allocation2 + $0x38] sm:$0xff] %v666
    %844 = vst [vmem:[#allocation2 + $0x40] sm:$0xff] %v670
    %845 = vst [vmem:[#allocation2 + $0x48] sm:$0xff] %v672
    %846 = vst [vmem:[#allocation2 + $0x50] sm:$0xff] %v676
    %847 = vst [vmem:[#allocation2 + $0x58] sm:$0xff] %v678
    %848 = vst [vmem:[#allocation2 + $0x60] sm:$0xff] %v682
    %849 = vst [vmem:[#allocation2 + $0x68] sm:$0xff] %v684
    %850 = vst [vmem:[#allocation2 + $0x70] sm:$0xff] %v688
    %851 = vst [vmem:[#allocation2 + $0x78] sm:$0xff] %v690
    %852 = vst [vmem:[#allocation2 + $0x80] sm:$0xff] %v694
    %853 = vst [vmem:[#allocation2 + $0x88] sm:$0xff] %v696
    %854 = vst [vmem:[#allocation2 + $0x90] sm:$0xff] %v700
    %855 = vst [vmem:[#allocation2 + $0x98] sm:$0xff] %v702
    %856 = vst [vmem:[#allocation2 + $0xa0] sm:$0xff] %v706
    %857 = vst [vmem:[#allocation2 + $0xa8] sm:$0xff] %v708
    %858 = vst [vmem:[#allocation2 + $0xb0] sm:$0xff] %v712
    %859 = vst [vmem:[#allocation2 + $0xb8] sm:$0xff] %v714
    %860 = vst [vmem:[#allocation2 + $0xc0] sm:$0xff] %v718
    %861 = vst [vmem:[#allocation2 + $0xc8] sm:$0xff] %v720
    %862 = vst [vmem:[#allocation2 + $0xd0] sm:$0xff] %v724
    %863 = vst [vmem:[#allocation2 + $0xd8] sm:$0xff] %v726
    %864 = vst [vmem:[#allocation2 + $0xe0] sm:$0xff] %v730
    %865 = vst [vmem:[#allocation2 + $0xe8] sm:$0xff] %v732
    %866 = vst [vmem:[#allocation2 + $0xf0] sm:$0xff] %v736
    %867 = vst [vmem:[#allocation2 + $0xf8] sm:$0xff] %v738
    %868 = vst [vmem:[#allocation2 + $0x100] sm:$0xff] %v742
    %869 = vst [vmem:[#allocation2 + $0x108] sm:$0xff] %v744
    %870 = vst [vmem:[#allocation2 + $0x110] sm:$0xff] %v748
    %871 = vst [vmem:[#allocation2 + $0x118] sm:$0xff] %v750
    %872 = vst [vmem:[#allocation2 + $0x120] sm:$0xff] %v754
    %873 = vst [vmem:[#allocation2 + $0x128] sm:$0xff] %v756
    %874 = vst [vmem:[#allocation2 + $0x130] sm:$0xff] %v760
    %875 = vst [vmem:[#allocation2 + $0x138] sm:$0xff] %v762
    %876 = vst [vmem:[#allocation2 + $0x140] sm:$0xff] %v766
    %877 = vst [vmem:[#allocation2 + $0x148] sm:$0xff] %v768
    %878 = vst [vmem:[#allocation2 + $0x150] sm:$0xff] %v772
    %879 = vst [vmem:[#allocation2 + $0x158] sm:$0xff] %v774
    %880 = vst [vmem:[#allocation2 + $0x160] sm:$0xff] %v778
    %881 = vst [vmem:[#allocation2 + $0x168] sm:$0xff] %v780
    %882 = vst [vmem:[#allocation2 + $0x170] sm:$0xff] %v784
    %883 = vst [vmem:[#allocation2 + $0x178] sm:$0xff] %v786
    %884 = vst [vmem:[#allocation2 + $0x180] sm:$0xff] %v790
    %885 = vst [vmem:[#allocation2 + $0x188] sm:$0xff] %v792
    %886 = vst [vmem:[#allocation2 + $0x190] sm:$0xff] %v796
    %887 = vst [vmem:[#allocation2 + $0x198] sm:$0xff] %v798
    %888 = vst [vmem:[#allocation2 + $0x1a0] sm:$0xff] %v802
    %889 = vst [vmem:[#allocation2 + $0x1a8] sm:$0xff] %v804
    %890 = vst [vmem:[#allocation2 + $0x1b0] sm:$0xff] %v808
    %891 = vst [vmem:[#allocation2 + $0x1b8] sm:$0xff] %v810
    %892 = vst [vmem:[#allocation2 + $0x1c0] sm:$0xff] %v814
    %893 = vst [vmem:[#allocation2 + $0x1c8] sm:$0xff] %v816
    %894 = vst [vmem:[#allocation2 + $0x1d0] sm:$0xff] %v820
    %895 = vst [vmem:[#allocation2 + $0x1d8] sm:$0xff] %v822
    %896 = vst [vmem:[#allocation2 + $0x1e0] sm:$0xff] %v826
    %897 = vst [vmem:[#allocation2 + $0x1e8] sm:$0xff] %v828
    %898 = vst [vmem:[#allocation2 + $0x1f0] sm:$0xff] %v832
    %899 = vst [vmem:[#allocation2 + $0x1f8] sm:$0xff] %v834
    %s900 = scalar_lea.vmem %s0, 256
    %v901 = vld [vmem:[%s900] sm:$0xff]
    %v902 = vld [vmem:[%s900 + $0x8] sm:$0xff]
    %v903 = vld [vmem:[%s900 + $0x10] sm:$0xff]
    %v904 = vld [vmem:[%s900 + $0x18] sm:$0xff]
    %v905 = vld [vmem:[%s900 + $0x20] sm:$0xff]
    %v906 = vld [vmem:[%s900 + $0x28] sm:$0xff]
    %v907 = vld [vmem:[%s900 + $0x30] sm:$0xff]
    %v908 = vld [vmem:[%s900 + $0x38] sm:$0xff]
    %v909 = vld [vmem:[%s900 + $0x40] sm:$0xff]
    %v910 = vld [vmem:[%s900 + $0x48] sm:$0xff]
    %v911 = vld [vmem:[%s900 + $0x50] sm:$0xff]
    %v912 = vld [vmem:[%s900 + $0x58] sm:$0xff]
    %v913 = vld [vmem:[%s900 + $0x60] sm:$0xff]
    %v914 = vld [vmem:[%s900 + $0x68] sm:$0xff]
    %v915 = vld [vmem:[%s900 + $0x70] sm:$0xff]
    %v916 = vld [vmem:[%s900 + $0x78] sm:$0xff]
    %v917 = vld [vmem:[%s900 + $0x80] sm:$0xff]
    %v918 = vld [vmem:[%s900 + $0x88] sm:$0xff]
    %v919 = vld [vmem:[%s900 + $0x90] sm:$0xff]
    %v920 = vld [vmem:[%s900 + $0x98] sm:$0xff]
    %v921 = vld [vmem:[%s900 + $0xa0] sm:$0xff]
    %v922 = vld [vmem:[%s900 + $0xa8] sm:$0xff]
    %v923 = vld [vmem:[%s900 + $0xb0] sm:$0xff]
    %v924 = vld [vmem:[%s900 + $0xb8] sm:$0xff]
    %v925 = vld [vmem:[%s900 + $0xc0] sm:$0xff]
    %v926 = vld [vmem:[%s900 + $0xc8] sm:$0xff]
    %v927 = vld [vmem:[%s900 + $0xd0] sm:$0xff]
    %v928 = vld [vmem:[%s900 + $0xd8] sm:$0xff]
    %v929 = vld [vmem:[%s900 + $0xe0] sm:$0xff]
    %v930 = vld [vmem:[%s900 + $0xe8] sm:$0xff]
    %v931 = vld [vmem:[%s900 + $0xf0] sm:$0xff]
    %v932 = vld [vmem:[%s900 + $0xf8] sm:$0xff]
    %933 = vmatprep.subr.mxu0 %v932
    %934 = vmatpush1.msra.mxu0 %v931
    %935 = vmatprep.subr.mxu0 %v930
    %936 = vmatpush1.msra.mxu0 %v929
    %937 = vmatprep.subr.mxu0 %v928
    %938 = vmatpush1.msra.mxu0 %v927
    %939 = vmatprep.subr.mxu0 %v926
    %940 = vmatpush1.msra.mxu0 %v925
    %941 = vmatprep.subr.mxu0 %v924
    %942 = vmatpush1.msra.mxu0 %v923
    %943 = vmatprep.subr.mxu0 %v922
    %944 = vmatpush1.msra.mxu0 %v921
    %945 = vmatprep.subr.mxu0 %v920
    %946 = vmatpush1.msra.mxu0 %v919
    %947 = vmatprep.subr.mxu0 %v918
    %948 = vmatpush1.msra.mxu0 %v917
    %949 = vmatprep.subr.mxu0 %v916
    %950 = vmatpush1.msra.mxu0 %v915
    %951 = vmatprep.subr.mxu0 %v914
    %952 = vmatpush1.msra.mxu0 %v913
    %953 = vmatprep.subr.mxu0 %v912
    %954 = vmatpush1.msra.mxu0 %v911
    %955 = vmatprep.subr.mxu0 %v910
    %956 = vmatpush1.msra.mxu0 %v909
    %957 = vmatprep.subr.mxu0 %v908
    %958 = vmatpush1.msra.mxu0 %v907
    %959 = vmatprep.subr.mxu0 %v906
    %960 = vmatpush1.msra.mxu0 %v905
    %961 = vmatprep.subr.mxu0 %v904
    %962 = vmatpush1.msra.mxu0 %v903
    %963 = vmatprep.subr.mxu0 %v902
    %964 = vmatpush1.msra.mxu0 %v901
    %965 = vmatprep.subr.mxu0 0.0
    %966 = vmatpush2.msra.mxu0 0.0
    %967 = vmatprep.subr.mxu0 0.0
    %968 = vmatpush2.msra.mxu0 0.0
    %969 = vmatprep.subr.mxu0 0.0
    %970 = vmatpush2.msra.mxu0 0.0
    %971 = vmatprep.subr.mxu0 0.0
    %972 = vmatpush2.msra.mxu0 0.0
    %973 = vmatprep.subr.mxu0 0.0
    %974 = vmatpush2.msra.mxu0 0.0
    %975 = vmatprep.subr.mxu0 0.0
    %976 = vmatpush2.msra.mxu0 0.0
    %977 = vmatprep.subr.mxu0 0.0
    %978 = vmatpush2.msra.mxu0 0.0
    %979 = vmatprep.subr.mxu0 0.0
    %980 = vmatpush2.msra.mxu0 0.0
    %981 = vmatprep.subr.mxu0 0.0
    %982 = vmatpush2.msra.mxu0 0.0
    %983 = vmatprep.subr.mxu0 0.0
    %984 = vmatpush2.msra.mxu0 0.0
    %985 = vmatprep.subr.mxu0 0.0
    %986 = vmatpush2.msra.mxu0 0.0
    %987 = vmatprep.subr.mxu0 0.0
    %988 = vmatpush2.msra.mxu0 0.0
    %989 = vmatprep.subr.mxu0 0.0
    %990 = vmatpush2.msra.mxu0 0.0
    %991 = vmatprep.subr.mxu0 0.0
    %992 = vmatpush2.msra.mxu0 0.0
    %993 = vmatprep.subr.mxu0 0.0
    %994 = vmatpush2.msra.mxu0 0.0
    %995 = vmatprep.subr.mxu0 0.0
    %996 = vmatpush2.msra.mxu0 0.0
    %997 = vmatprep.mubr.f32.mxu0 0.0
    %998 = vmatmul.mubr.f32.gmra.mxu0 %v17
    %v999 = vpop.f32.mrf.mxu0
    %v1000 = vadd.f32 %v84, %v999
    %v1001 = vpop.f32.mrf.mxu0
    %v1002 = vadd.f32 %v84, %v1001
    %1003 = vmatprep.mubr.f32.mxu0 0.0
    %1004 = vmatmul.mubr.f32.gmra.mxu0 %v18
    %v1005 = vpop.f32.mrf.mxu0
    %v1006 = vadd.f32 %v89, %v1005
    %v1007 = vpop.f32.mrf.mxu0
    %v1008 = vadd.f32 %v89, %v1007
    %1009 = vmatprep.mubr.f32.mxu0 0.0
    %1010 = vmatmul.mubr.f32.gmra.mxu0 %v19
    %v1011 = vpop.f32.mrf.mxu0
    %v1012 = vadd.f32 %v94, %v1011
    %v1013 = vpop.f32.mrf.mxu0
    %v1014 = vadd.f32 %v94, %v1013
    %1015 = vmatprep.mubr.f32.mxu0 0.0
    %1016 = vmatmul.mubr.f32.gmra.mxu0 %v20
    %v1017 = vpop.f32.mrf.mxu0
    %v1018 = vadd.f32 %v99, %v1017
    %v1019 = vpop.f32.mrf.mxu0
    %v1020 = vadd.f32 %v99, %v1019
    %1021 = vmatprep.mubr.f32.mxu0 0.0
    %1022 = vmatmul.mubr.f32.gmra.mxu0 %v21
    %v1023 = vpop.f32.mrf.mxu0
    %v1024 = vadd.f32 %v104, %v1023
    %v1025 = vpop.f32.mrf.mxu0
    %v1026 = vadd.f32 %v104, %v1025
    %1027 = vmatprep.mubr.f32.mxu0 0.0
    %1028 = vmatmul.mubr.f32.gmra.mxu0 %v22
    %v1029 = vpop.f32.mrf.mxu0
    %v1030 = vadd.f32 %v109, %v1029
    %v1031 = vpop.f32.mrf.mxu0
    %v1032 = vadd.f32 %v109, %v1031
    %1033 = vmatprep.mubr.f32.mxu0 0.0
    %1034 = vmatmul.mubr.f32.gmra.mxu0 %v23
    %v1035 = vpop.f32.mrf.mxu0
    %v1036 = vadd.f32 %v114, %v1035
    %v1037 = vpop.f32.mrf.mxu0
    %v1038 = vadd.f32 %v114, %v1037
    %1039 = vmatprep.mubr.f32.mxu0 0.0
    %1040 = vmatmul.mubr.f32.gmra.mxu0 %v24
    %v1041 = vpop.f32.mrf.mxu0
    %v1042 = vadd.f32 %v119, %v1041
    %v1043 = vpop.f32.mrf.mxu0
    %v1044 = vadd.f32 %v119, %v1043
    %1045 = vmatprep.mubr.f32.mxu0 0.0
    %1046 = vmatmul.mubr.f32.gmra.mxu0 %v25
    %v1047 = vpop.f32.mrf.mxu0
    %v1048 = vadd.f32 %v124, %v1047
    %v1049 = vpop.f32.mrf.mxu0
    %v1050 = vadd.f32 %v124, %v1049
    %1051 = vmatprep.mubr.f32.mxu0 0.0
    %1052 = vmatmul.mubr.f32.gmra.mxu0 %v26
    %v1053 = vpop.f32.mrf.mxu0
    %v1054 = vadd.f32 %v129, %v1053
    %v1055 = vpop.f32.mrf.mxu0
    %v1056 = vadd.f32 %v129, %v1055
    %1057 = vmatprep.mubr.f32.mxu0 0.0
    %1058 = vmatmul.mubr.f32.gmra.mxu0 %v27
    %v1059 = vpop.f32.mrf.mxu0
    %v1060 = vadd.f32 %v134, %v1059
    %v1061 = vpop.f32.mrf.mxu0
    %v1062 = vadd.f32 %v134, %v1061
    %1063 = vmatprep.mubr.f32.mxu0 0.0
    %1064 = vmatmul.mubr.f32.gmra.mxu0 %v28
    %v1065 = vpop.f32.mrf.mxu0
    %v1066 = vadd.f32 %v139, %v1065
    %v1067 = vpop.f32.mrf.mxu0
    %v1068 = vadd.f32 %v139, %v1067
    %1069 = vmatprep.mubr.f32.mxu0 0.0
    %1070 = vmatmul.mubr.f32.gmra.mxu0 %v29
    %v1071 = vpop.f32.mrf.mxu0
    %v1072 = vadd.f32 %v144, %v1071
    %v1073 = vpop.f32.mrf.mxu0
    %v1074 = vadd.f32 %v144, %v1073
    %1075 = vmatprep.mubr.f32.mxu0 0.0
    %1076 = vmatmul.mubr.f32.gmra.mxu0 %v30
    %v1077 = vpop.f32.mrf.mxu0
    %v1078 = vadd.f32 %v149, %v1077
    %v1079 = vpop.f32.mrf.mxu0
    %v1080 = vadd.f32 %v149, %v1079
    %1081 = vmatprep.mubr.f32.mxu0 0.0
    %1082 = vmatmul.mubr.f32.gmra.mxu0 %v31
    %v1083 = vpop.f32.mrf.mxu0
    %v1084 = vadd.f32 %v154, %v1083
    %v1085 = vpop.f32.mrf.mxu0
    %v1086 = vadd.f32 %v154, %v1085
    %1087 = vmatprep.mubr.f32.mxu0 0.0
    %1088 = vmatmul.mubr.f32.gmra.mxu0 %v32
    %v1089 = vpop.f32.mrf.mxu0
    %v1090 = vadd.f32 %v159, %v1089
    %v1091 = vpop.f32.mrf.mxu0
    %v1092 = vadd.f32 %v159, %v1091
    %1093 = vdwg.mxu0
    %v1094 = vmax.f32 %v1000, 0.0
    %v1095 = vmax.f32 %v1002, 0.0
    %v1096 = vmax.f32 %v1006, 0.0
    %v1097 = vmax.f32 %v1008, 0.0
    %v1098 = vmax.f32 %v1012, 0.0
    %v1099 = vmax.f32 %v1014, 0.0
    %v1100 = vmax.f32 %v1018, 0.0
    %v1101 = vmax.f32 %v1020, 0.0
    %v1102 = vmax.f32 %v1024, 0.0
    %v1103 = vmax.f32 %v1026, 0.0
    %v1104 = vmax.f32 %v1030, 0.0
    %v1105 = vmax.f32 %v1032, 0.0
    %v1106 = vmax.f32 %v1036, 0.0
    %v1107 = vmax.f32 %v1038, 0.0
    %v1108 = vmax.f32 %v1042, 0.0
    %v1109 = vmax.f32 %v1044, 0.0
    %v1110 = vmax.f32 %v1048, 0.0
    %v1111 = vmax.f32 %v1050, 0.0
    %v1112 = vmax.f32 %v1054, 0.0
    %v1113 = vmax.f32 %v1056, 0.0
    %v1114 = vmax.f32 %v1060, 0.0
    %v1115 = vmax.f32 %v1062, 0.0
    %v1116 = vmax.f32 %v1066, 0.0
    %v1117 = vmax.f32 %v1068, 0.0
    %v1118 = vmax.f32 %v1072, 0.0
    %v1119 = vmax.f32 %v1074, 0.0
    %v1120 = vmax.f32 %v1078, 0.0
    %v1121 = vmax.f32 %v1080, 0.0
    %v1122 = vmax.f32 %v1084, 0.0
    %v1123 = vmax.f32 %v1086, 0.0
    %v1124 = vmax.f32 %v1090, 0.0
    %v1125 = vmax.f32 %v1092, 0.0
    %1126 = vmatprep.subr.mxu0 %v1125
    %1127 = vmatpush1.xpose.msra.mxu0 %v1124
    %1128 = vmatprep.subr.mxu0 %v1123
    %1129 = vmatpush1.xpose.msra.mxu0 %v1122
    %1130 = vmatprep.subr.mxu0 %v1121
    %1131 = vmatpush1.xpose.msra.mxu0 %v1120
    %1132 = vmatprep.subr.mxu0 %v1119
    %1133 = vmatpush1.xpose.msra.mxu0 %v1118
    %1134 = vmatprep.subr.mxu0 %v1117
    %1135 = vmatpush1.xpose.msra.mxu0 %v1116
    %1136 = vmatprep.subr.mxu0 %v1115
    %1137 = vmatpush1.xpose.msra.mxu0 %v1114
    %1138 = vmatprep.subr.mxu0 %v1113
    %1139 = vmatpush1.xpose.msra.mxu0 %v1112
    %1140 = vmatprep.subr.mxu0 %v1111
    %1141 = vmatpush1.xpose.msra.mxu0 %v1110
    %1142 = vmatprep.subr.mxu0 %v1109
    %1143 = vmatpush1.xpose.msra.mxu0 %v1108
    %1144 = vmatprep.subr.mxu0 %v1107
    %1145 = vmatpush1.xpose.msra.mxu0 %v1106
    %1146 = vmatprep.subr.mxu0 %v1105
    %1147 = vmatpush1.xpose.msra.mxu0 %v1104
    %1148 = vmatprep.subr.mxu0 %v1103
    %1149 = vmatpush1.xpose.msra.mxu0 %v1102
    %1150 = vmatprep.subr.mxu0 %v1101
    %1151 = vmatpush1.xpose.msra.mxu0 %v1100
    %1152 = vmatprep.subr.mxu0 %v1099
    %1153 = vmatpush1.xpose.msra.mxu0 %v1098
    %1154 = vmatprep.subr.mxu0 %v1097
    %1155 = vmatpush1.xpose.msra.mxu0 %v1096
    %1156 = vmatprep.subr.mxu0 %v1095
    %1157 = vmatpush1.xpose.msra.mxu0 %v1094
    %1158 = vmatprep.subr.mxu0 0.0
    %1159 = vmatpush2.xpose.msra.mxu0 0.0
    %1160 = vmatprep.subr.mxu0 0.0
    %1161 = vmatpush2.xpose.msra.mxu0 0.0
    %1162 = vmatprep.subr.mxu0 0.0
    %1163 = vmatpush2.xpose.msra.mxu0 0.0
    %1164 = vmatprep.subr.mxu0 0.0
    %1165 = vmatpush2.xpose.msra.mxu0 0.0
    %1166 = vmatprep.subr.mxu0 0.0
    %1167 = vmatpush2.xpose.msra.mxu0 0.0
    %1168 = vmatprep.subr.mxu0 0.0
    %1169 = vmatpush2.xpose.msra.mxu0 0.0
    %1170 = vmatprep.subr.mxu0 0.0
    %1171 = vmatpush2.xpose.msra.mxu0 0.0
    %1172 = vmatprep.subr.mxu0 0.0
    %1173 = vmatpush2.xpose.msra.mxu0 0.0
    %1174 = vmatprep.subr.mxu0 0.0
    %1175 = vmatpush2.xpose.msra.mxu0 0.0
    %1176 = vmatprep.subr.mxu0 0.0
    %1177 = vmatpush2.xpose.msra.mxu0 0.0
    %1178 = vmatprep.subr.mxu0 0.0
    %1179 = vmatpush2.xpose.msra.mxu0 0.0
    %1180 = vmatprep.subr.mxu0 0.0
    %1181 = vmatpush2.xpose.msra.mxu0 0.0
    %1182 = vmatprep.subr.mxu0 0.0
    %1183 = vmatpush2.xpose.msra.mxu0 0.0
    %1184 = vmatprep.subr.mxu0 0.0
    %1185 = vmatpush2.xpose.msra.mxu0 0.0
    %1186 = vmatprep.subr.mxu0 0.0
    %1187 = vmatpush2.xpose.msra.mxu0 0.0
    %1188 = vmatprep.subr.mxu0 0.0
    %1189 = vmatpush2.xpose.msra.mxu0 0.0
    %1190 = vmatprep.mubr.f32.mxu0 %v1095
    %1191 = vmatmul.mubr.f32.gmra.mxu0 %v1094
    %v1192 = vpop.f32.mrf.mxu0
    %v1193 = vadd.f32 0.0, %v1192
    %v1194 = vpop.f32.mrf.mxu0
    %1195 = vmatprep.mubr.f32.mxu0 %v1097
    %1196 = vmatmul.mubr.f32.gmra.mxu0 %v1096
    %v1197 = vpop.f32.mrf.mxu0
    %v1198 = vadd.f32 0.0, %v1197
    %v1199 = vpop.f32.mrf.mxu0
    %1200 = vmatprep.mubr.f32.mxu0 %v1099
    %1201 = vmatmul.mubr.f32.gmra.mxu0 %v1098
    %v1202 = vpop.f32.mrf.mxu0
    %v1203 = vadd.f32 0.0, %v1202
    %v1204 = vpop.f32.mrf.mxu0
    %1205 = vmatprep.mubr.f32.mxu0 %v1101
    %1206 = vmatmul.mubr.f32.gmra.mxu0 %v1100
    %v1207 = vpop.f32.mrf.mxu0
    %v1208 = vadd.f32 0.0, %v1207
    %v1209 = vpop.f32.mrf.mxu0
    %1210 = vmatprep.mubr.f32.mxu0 %v1103
    %1211 = vmatmul.mubr.f32.gmra.mxu0 %v1102
    %v1212 = vpop.f32.mrf.mxu0
    %v1213 = vadd.f32 0.0, %v1212
    %v1214 = vpop.f32.mrf.mxu0
    %1215 = vmatprep.mubr.f32.mxu0 %v1105
    %1216 = vmatmul.mubr.f32.gmra.mxu0 %v1104
    %v1217 = vpop.f32.mrf.mxu0
    %v1218 = vadd.f32 0.0, %v1217
    %v1219 = vpop.f32.mrf.mxu0
    %1220 = vmatprep.mubr.f32.mxu0 %v1107
    %1221 = vmatmul.mubr.f32.gmra.mxu0 %v1106
    %v1222 = vpop.f32.mrf.mxu0
    %v1223 = vadd.f32 0.0, %v1222
    %v1224 = vpop.f32.mrf.mxu0
    %1225 = vmatprep.mubr.f32.mxu0 %v1109
    %1226 = vmatmul.mubr.f32.gmra.mxu0 %v1108
    %v1227 = vpop.f32.mrf.mxu0
    %v1228 = vadd.f32 0.0, %v1227
    %v1229 = vpop.f32.mrf.mxu0
    %1230 = vmatprep.mubr.f32.mxu0 %v1111
    %1231 = vmatmul.mubr.f32.gmra.mxu0 %v1110
    %v1232 = vpop.f32.mrf.mxu0
    %v1233 = vadd.f32 0.0, %v1232
    %v1234 = vpop.f32.mrf.mxu0
    %1235 = vmatprep.mubr.f32.mxu0 %v1113
    %1236 = vmatmul.mubr.f32.gmra.mxu0 %v1112
    %v1237 = vpop.f32.mrf.mxu0
    %v1238 = vadd.f32 0.0, %v1237
    %v1239 = vpop.f32.mrf.mxu0
    %1240 = vmatprep.mubr.f32.mxu0 %v1115
    %1241 = vmatmul.mubr.f32.gmra.mxu0 %v1114
    %v1242 = vpop.f32.mrf.mxu0
    %v1243 = vadd.f32 0.0, %v1242
    %v1244 = vpop.f32.mrf.mxu0
    %1245 = vmatprep.mubr.f32.mxu0 %v1117
    %1246 = vmatmul.mubr.f32.gmra.mxu0 %v1116
    %v1247 = vpop.f32.mrf.mxu0
    %v1248 = vadd.f32 0.0, %v1247
    %v1249 = vpop.f32.mrf.mxu0
    %1250 = vmatprep.mubr.f32.mxu0 %v1119
    %1251 = vmatmul.mubr.f32.gmra.mxu0 %v1118
    %v1252 = vpop.f32.mrf.mxu0
    %v1253 = vadd.f32 0.0, %v1252
    %v1254 = vpop.f32.mrf.mxu0
    %1255 = vmatprep.mubr.f32.mxu0 %v1121
    %1256 = vmatmul.mubr.f32.gmra.mxu0 %v1120
    %v1257 = vpop.f32.mrf.mxu0
    %v1258 = vadd.f32 0.0, %v1257
    %v1259 = vpop.f32.mrf.mxu0
    %1260 = vmatprep.mubr.f32.mxu0 %v1123
    %1261 = vmatmul.mubr.f32.gmra.mxu0 %v1122
    %v1262 = vpop.f32.mrf.mxu0
    %v1263 = vadd.f32 0.0, %v1262
    %v1264 = vpop.f32.mrf.mxu0
    %1265 = vmatprep.mubr.f32.mxu0 %v1125
    %1266 = vmatmul.mubr.f32.gmra.mxu0 %v1124
    %v1267 = vpop.f32.mrf.mxu0
    %v1268 = vadd.f32 0.0, %v1267
    %v1269 = vpop.f32.mrf.mxu0
    %1270 = vdwg.mxu0
    %s1271 = scalar_lea.vmem %s3, 128
    %1272 = vst [vmem:[%s1271] sm:$0xff] %v1193
    %1273 = vst [vmem:[%s1271 + $0x8] sm:$0xff] %v1198
    %1274 = vst [vmem:[%s1271 + $0x10] sm:$0xff] %v1203
    %1275 = vst [vmem:[%s1271 + $0x18] sm:$0xff] %v1208
    %1276 = vst [vmem:[%s1271 + $0x20] sm:$0xff] %v1213
    %1277 = vst [vmem:[%s1271 + $0x28] sm:$0xff] %v1218
    %1278 = vst [vmem:[%s1271 + $0x30] sm:$0xff] %v1223
    %1279 = vst [vmem:[%s1271 + $0x38] sm:$0xff] %v1228
    %1280 = vst [vmem:[%s1271 + $0x40] sm:$0xff] %v1233
    %1281 = vst [vmem:[%s1271 + $0x48] sm:$0xff] %v1238
    %1282 = vst [vmem:[%s1271 + $0x50] sm:$0xff] %v1243
    %1283 = vst [vmem:[%s1271 + $0x58] sm:$0xff] %v1248
    %1284 = vst [vmem:[%s1271 + $0x60] sm:$0xff] %v1253
    %1285 = vst [vmem:[%s1271 + $0x68] sm:$0xff] %v1258
    %1286 = vst [vmem:[%s1271 + $0x70] sm:$0xff] %v1263
    %1287 = vst [vmem:[%s1271 + $0x78] sm:$0xff] %v1268
    %1288 = vxpose.xlu0.b32.start [1/16] %v1094, 128
    %1289 = vxpose.xlu0.b32.cont [2/16] %v1096, 128
    %1290 = vxpose.xlu0.b32.cont [3/16] %v1098, 128
    %1291 = vxpose.xlu0.b32.cont [4/16] %v1100, 128
    %1292 = vxpose.xlu0.b32.cont [5/16] %v1102, 128
    %1293 = vxpose.xlu0.b32.cont [6/16] %v1104, 128
    %1294 = vxpose.xlu0.b32.cont [7/16] %v1106, 128
    %1295 = vxpose.xlu0.b32.cont [8/16] %v1108, 128
    %1296 = vxpose.xlu0.b32.cont [9/16] %v1110, 128
    %1297 = vxpose.xlu0.b32.cont [10/16] %v1112, 128
    %1298 = vxpose.xlu0.b32.cont [11/16] %v1114, 128
    %1299 = vxpose.xlu0.b32.cont [12/16] %v1116, 128
    %1300 = vxpose.xlu0.b32.cont [13/16] %v1118, 128
    %1301 = vxpose.xlu0.b32.cont [14/16] %v1120, 128
    %1302 = vxpose.xlu0.b32.cont [15/16] %v1122, 128
    %1303 = vxpose.xlu0.b32.end [16/16] %v1124, 128
    %v1304 = vpop.trf.xlu0
    %v1305 = vpop.trf.xlu0
    %v1306 = vpop.trf.xlu0
    %v1307 = vpop.trf.xlu0
    %v1308 = vpop.trf.xlu0
    %v1309 = vpop.trf.xlu0
    %v1310 = vpop.trf.xlu0
    %v1311 = vpop.trf.xlu0
    %v1312 = vpop.trf.xlu0
    %v1313 = vpop.trf.xlu0
    %v1314 = vpop.trf.xlu0
    %v1315 = vpop.trf.xlu0
    %v1316 = vpop.trf.xlu0
    %v1317 = vpop.trf.xlu0
    %v1318 = vpop.trf.xlu0
    %v1319 = vpop.trf.xlu0
    %1320 = vxpose.xlu0.b32.start [1/16] %v1095, 128
    %1321 = vxpose.xlu0.b32.cont [2/16] %v1097, 128
    %1322 = vxpose.xlu0.b32.cont [3/16] %v1099, 128
    %1323 = vxpose.xlu0.b32.cont [4/16] %v1101, 128
    %1324 = vxpose.xlu0.b32.cont [5/16] %v1103, 128
    %1325 = vxpose.xlu0.b32.cont [6/16] %v1105, 128
    %1326 = vxpose.xlu0.b32.cont [7/16] %v1107, 128
    %1327 = vxpose.xlu0.b32.cont [8/16] %v1109, 128
    %1328 = vxpose.xlu0.b32.cont [9/16] %v1111, 128
    %1329 = vxpose.xlu0.b32.cont [10/16] %v1113, 128
    %1330 = vxpose.xlu0.b32.cont [11/16] %v1115, 128
    %1331 = vxpose.xlu0.b32.cont [12/16] %v1117, 128
    %1332 = vxpose.xlu0.b32.cont [13/16] %v1119, 128
    %1333 = vxpose.xlu0.b32.cont [14/16] %v1121, 128
    %1334 = vxpose.xlu0.b32.cont [15/16] %v1123, 128
    %1335 = vxpose.xlu0.b32.end [16/16] %v1125, 128
    %v1336 = vpop.trf.xlu0
    %v1337 = vpop.trf.xlu0
    %v1338 = vpop.trf.xlu0
    %v1339 = vpop.trf.xlu0
    %v1340 = vpop.trf.xlu0
    %v1341 = vpop.trf.xlu0
    %v1342 = vpop.trf.xlu0
    %v1343 = vpop.trf.xlu0
    %v1344 = vpop.trf.xlu0
    %v1345 = vpop.trf.xlu0
    %v1346 = vpop.trf.xlu0
    %v1347 = vpop.trf.xlu0
    %v1348 = vpop.trf.xlu0
    %v1349 = vpop.trf.xlu0
    %v1350 = vpop.trf.xlu0
    %v1351 = vpop.trf.xlu0
    %1352 = vmatprep.subr.mxu0 %v1125
    %1353 = vmatpush1.msra.mxu0 %v1124
    %1354 = vmatprep.subr.mxu0 %v1123
    %1355 = vmatpush1.msra.mxu0 %v1122
    %1356 = vmatprep.subr.mxu0 %v1121
    %1357 = vmatpush1.msra.mxu0 %v1120
    %1358 = vmatprep.subr.mxu0 %v1119
    %1359 = vmatpush1.msra.mxu0 %v1118
    %1360 = vmatprep.subr.mxu0 %v1117
    %1361 = vmatpush1.msra.mxu0 %v1116
    %1362 = vmatprep.subr.mxu0 %v1115
    %1363 = vmatpush1.msra.mxu0 %v1114
    %1364 = vmatprep.subr.mxu0 %v1113
    %1365 = vmatpush1.msra.mxu0 %v1112
    %1366 = vmatprep.subr.mxu0 %v1111
    %1367 = vmatpush1.msra.mxu0 %v1110
    %1368 = vmatprep.subr.mxu0 %v1109
    %1369 = vmatpush1.msra.mxu0 %v1108
    %1370 = vmatprep.subr.mxu0 %v1107
    %1371 = vmatpush1.msra.mxu0 %v1106
    %1372 = vmatprep.subr.mxu0 %v1105
    %1373 = vmatpush1.msra.mxu0 %v1104
    %1374 = vmatprep.subr.mxu0 %v1103
    %1375 = vmatpush1.msra.mxu0 %v1102
    %1376 = vmatprep.subr.mxu0 %v1101
    %1377 = vmatpush1.msra.mxu0 %v1100
    %1378 = vmatprep.subr.mxu0 %v1099
    %1379 = vmatpush1.msra.mxu0 %v1098
    %1380 = vmatprep.subr.mxu0 %v1097
    %1381 = vmatpush1.msra.mxu0 %v1096
    %1382 = vmatprep.subr.mxu0 %v1095
    %1383 = vmatpush1.msra.mxu0 %v1094
    %1384 = vmatprep.subr.mxu0 0.0
    %1385 = vmatpush2.msra.mxu0 0.0
    %1386 = vmatprep.subr.mxu0 0.0
    %1387 = vmatpush2.msra.mxu0 0.0
    %1388 = vmatprep.subr.mxu0 0.0
    %1389 = vmatpush2.msra.mxu0 0.0
    %1390 = vmatprep.subr.mxu0 0.0
    %1391 = vmatpush2.msra.mxu0 0.0
    %1392 = vmatprep.subr.mxu0 0.0
    %1393 = vmatpush2.msra.mxu0 0.0
    %1394 = vmatprep.subr.mxu0 0.0
    %1395 = vmatpush2.msra.mxu0 0.0
    %1396 = vmatprep.subr.mxu0 0.0
    %1397 = vmatpush2.msra.mxu0 0.0
    %1398 = vmatprep.subr.mxu0 0.0
    %1399 = vmatpush2.msra.mxu0 0.0
    %1400 = vmatprep.subr.mxu0 0.0
    %1401 = vmatpush2.msra.mxu0 0.0
    %1402 = vmatprep.subr.mxu0 0.0
    %1403 = vmatpush2.msra.mxu0 0.0
    %1404 = vmatprep.subr.mxu0 0.0
    %1405 = vmatpush2.msra.mxu0 0.0
    %1406 = vmatprep.subr.mxu0 0.0
    %1407 = vmatpush2.msra.mxu0 0.0
    %1408 = vmatprep.subr.mxu0 0.0
    %1409 = vmatpush2.msra.mxu0 0.0
    %1410 = vmatprep.subr.mxu0 0.0
    %1411 = vmatpush2.msra.mxu0 0.0
    %1412 = vmatprep.subr.mxu0 0.0
    %1413 = vmatpush2.msra.mxu0 0.0
    %1414 = vmatprep.subr.mxu0 0.0
    %1415 = vmatpush2.msra.mxu0 0.0
    %1416 = vmatprep.mubr.f32.mxu0 0.0
    %1417 = vmatmul.mubr.f32.gmra.mxu0 %v1304
    %v1418 = vpop.f32.mrf.mxu0
    %v1419 = vadd.f32 0.0, %v1418
    %v1420 = vpop.f32.mrf.mxu0
    %v1421 = vadd.f32 0.0, %v1420
    %1422 = vmatprep.mubr.f32.mxu0 0.0
    %1423 = vmatmul.mubr.f32.gmra.mxu0 %v1305
    %v1424 = vpop.f32.mrf.mxu0
    %v1425 = vadd.f32 0.0, %v1424
    %v1426 = vpop.f32.mrf.mxu0
    %v1427 = vadd.f32 0.0, %v1426
    %1428 = vmatprep.mubr.f32.mxu0 0.0
    %1429 = vmatmul.mubr.f32.gmra.mxu0 %v1306
    %v1430 = vpop.f32.mrf.mxu0
    %v1431 = vadd.f32 0.0, %v1430
    %v1432 = vpop.f32.mrf.mxu0
    %v1433 = vadd.f32 0.0, %v1432
    %1434 = vmatprep.mubr.f32.mxu0 0.0
    %1435 = vmatmul.mubr.f32.gmra.mxu0 %v1307
    %v1436 = vpop.f32.mrf.mxu0
    %v1437 = vadd.f32 0.0, %v1436
    %v1438 = vpop.f32.mrf.mxu0
    %v1439 = vadd.f32 0.0, %v1438
    %1440 = vmatprep.mubr.f32.mxu0 0.0
    %1441 = vmatmul.mubr.f32.gmra.mxu0 %v1308
    %v1442 = vpop.f32.mrf.mxu0
    %v1443 = vadd.f32 0.0, %v1442
    %v1444 = vpop.f32.mrf.mxu0
    %v1445 = vadd.f32 0.0, %v1444
    %1446 = vmatprep.mubr.f32.mxu0 0.0
    %1447 = vmatmul.mubr.f32.gmra.mxu0 %v1309
    %v1448 = vpop.f32.mrf.mxu0
    %v1449 = vadd.f32 0.0, %v1448
    %v1450 = vpop.f32.mrf.mxu0
    %v1451 = vadd.f32 0.0, %v1450
    %1452 = vmatprep.mubr.f32.mxu0 0.0
    %1453 = vmatmul.mubr.f32.gmra.mxu0 %v1310
    %v1454 = vpop.f32.mrf.mxu0
    %v1455 = vadd.f32 0.0, %v1454
    %v1456 = vpop.f32.mrf.mxu0
    %v1457 = vadd.f32 0.0, %v1456
    %1458 = vmatprep.mubr.f32.mxu0 0.0
    %1459 = vmatmul.mubr.f32.gmra.mxu0 %v1311
    %v1460 = vpop.f32.mrf.mxu0
    %v1461 = vadd.f32 0.0, %v1460
    %v1462 = vpop.f32.mrf.mxu0
    %v1463 = vadd.f32 0.0, %v1462
    %1464 = vmatprep.mubr.f32.mxu0 0.0
    %1465 = vmatmul.mubr.f32.gmra.mxu0 %v1312
    %v1466 = vpop.f32.mrf.mxu0
    %v1467 = vadd.f32 0.0, %v1466
    %v1468 = vpop.f32.mrf.mxu0
    %v1469 = vadd.f32 0.0, %v1468
    %1470 = vmatprep.mubr.f32.mxu0 0.0
    %1471 = vmatmul.mubr.f32.gmra.mxu0 %v1313
    %v1472 = vpop.f32.mrf.mxu0
    %v1473 = vadd.f32 0.0, %v1472
    %v1474 = vpop.f32.mrf.mxu0
    %v1475 = vadd.f32 0.0, %v1474
    %1476 = vmatprep.mubr.f32.mxu0 0.0
    %1477 = vmatmul.mubr.f32.gmra.mxu0 %v1314
    %v1478 = vpop.f32.mrf.mxu0
    %v1479 = vadd.f32 0.0, %v1478
    %v1480 = vpop.f32.mrf.mxu0
    %v1481 = vadd.f32 0.0, %v1480
    %1482 = vmatprep.mubr.f32.mxu0 0.0
    %1483 = vmatmul.mubr.f32.gmra.mxu0 %v1315
    %v1484 = vpop.f32.mrf.mxu0
    %v1485 = vadd.f32 0.0, %v1484
    %v1486 = vpop.f32.mrf.mxu0
    %v1487 = vadd.f32 0.0, %v1486
    %1488 = vmatprep.mubr.f32.mxu0 0.0
    %1489 = vmatmul.mubr.f32.gmra.mxu0 %v1316
    %v1490 = vpop.f32.mrf.mxu0
    %v1491 = vadd.f32 0.0, %v1490
    %v1492 = vpop.f32.mrf.mxu0
    %v1493 = vadd.f32 0.0, %v1492
    %1494 = vmatprep.mubr.f32.mxu0 0.0
    %1495 = vmatmul.mubr.f32.gmra.mxu0 %v1317
    %v1496 = vpop.f32.mrf.mxu0
    %v1497 = vadd.f32 0.0, %v1496
    %v1498 = vpop.f32.mrf.mxu0
    %v1499 = vadd.f32 0.0, %v1498
    %1500 = vmatprep.mubr.f32.mxu0 0.0
    %1501 = vmatmul.mubr.f32.gmra.mxu0 %v1318
    %v1502 = vpop.f32.mrf.mxu0
    %v1503 = vadd.f32 0.0, %v1502
    %v1504 = vpop.f32.mrf.mxu0
    %v1505 = vadd.f32 0.0, %v1504
    %1506 = vmatprep.mubr.f32.mxu0 0.0
    %1507 = vmatmul.mubr.f32.gmra.mxu0 %v1319
    %v1508 = vpop.f32.mrf.mxu0
    %v1509 = vadd.f32 0.0, %v1508
    %v1510 = vpop.f32.mrf.mxu0
    %v1511 = vadd.f32 0.0, %v1510
    %1512 = vmatprep.mubr.f32.mxu0 0.0
    %1513 = vmatmul.mubr.f32.gmra.mxu0 %v1336
    %v1514 = vpop.f32.mrf.mxu0
    %v1515 = vadd.f32 0.0, %v1514
    %v1516 = vpop.f32.mrf.mxu0
    %v1517 = vadd.f32 0.0, %v1516
    %1518 = vmatprep.mubr.f32.mxu0 0.0
    %1519 = vmatmul.mubr.f32.gmra.mxu0 %v1337
    %v1520 = vpop.f32.mrf.mxu0
    %v1521 = vadd.f32 0.0, %v1520
    %v1522 = vpop.f32.mrf.mxu0
    %v1523 = vadd.f32 0.0, %v1522
    %1524 = vmatprep.mubr.f32.mxu0 0.0
    %1525 = vmatmul.mubr.f32.gmra.mxu0 %v1338
    %v1526 = vpop.f32.mrf.mxu0
    %v1527 = vadd.f32 0.0, %v1526
    %v1528 = vpop.f32.mrf.mxu0
    %v1529 = vadd.f32 0.0, %v1528
    %1530 = vmatprep.mubr.f32.mxu0 0.0
    %1531 = vmatmul.mubr.f32.gmra.mxu0 %v1339
    %v1532 = vpop.f32.mrf.mxu0
    %v1533 = vadd.f32 0.0, %v1532
    %v1534 = vpop.f32.mrf.mxu0
    %v1535 = vadd.f32 0.0, %v1534
    %1536 = vmatprep.mubr.f32.mxu0 0.0
    %1537 = vmatmul.mubr.f32.gmra.mxu0 %v1340
    %v1538 = vpop.f32.mrf.mxu0
    %v1539 = vadd.f32 0.0, %v1538
    %v1540 = vpop.f32.mrf.mxu0
    %v1541 = vadd.f32 0.0, %v1540
    %1542 = vmatprep.mubr.f32.mxu0 0.0
    %1543 = vmatmul.mubr.f32.gmra.mxu0 %v1341
    %v1544 = vpop.f32.mrf.mxu0
    %v1545 = vadd.f32 0.0, %v1544
    %v1546 = vpop.f32.mrf.mxu0
    %v1547 = vadd.f32 0.0, %v1546
    %1548 = vmatprep.mubr.f32.mxu0 0.0
    %1549 = vmatmul.mubr.f32.gmra.mxu0 %v1342
    %v1550 = vpop.f32.mrf.mxu0
    %v1551 = vadd.f32 0.0, %v1550
    %v1552 = vpop.f32.mrf.mxu0
    %v1553 = vadd.f32 0.0, %v1552
    %1554 = vmatprep.mubr.f32.mxu0 0.0
    %1555 = vmatmul.mubr.f32.gmra.mxu0 %v1343
    %v1556 = vpop.f32.mrf.mxu0
    %v1557 = vadd.f32 0.0, %v1556
    %v1558 = vpop.f32.mrf.mxu0
    %v1559 = vadd.f32 0.0, %v1558
    %1560 = vmatprep.mubr.f32.mxu0 0.0
    %1561 = vmatmul.mubr.f32.gmra.mxu0 %v1344
    %v1562 = vpop.f32.mrf.mxu0
    %v1563 = vadd.f32 0.0, %v1562
    %v1564 = vpop.f32.mrf.mxu0
    %v1565 = vadd.f32 0.0, %v1564
    %1566 = vmatprep.mubr.f32.mxu0 0.0
    %1567 = vmatmul.mubr.f32.gmra.mxu0 %v1345
    %v1568 = vpop.f32.mrf.mxu0
    %v1569 = vadd.f32 0.0, %v1568
    %v1570 = vpop.f32.mrf.mxu0
    %v1571 = vadd.f32 0.0, %v1570
    %1572 = vmatprep.mubr.f32.mxu0 0.0
    %1573 = vmatmul.mubr.f32.gmra.mxu0 %v1346
    %v1574 = vpop.f32.mrf.mxu0
    %v1575 = vadd.f32 0.0, %v1574
    %v1576 = vpop.f32.mrf.mxu0
    %v1577 = vadd.f32 0.0, %v1576
    %1578 = vmatprep.mubr.f32.mxu0 0.0
    %1579 = vmatmul.mubr.f32.gmra.mxu0 %v1347
    %v1580 = vpop.f32.mrf.mxu0
    %v1581 = vadd.f32 0.0, %v1580
    %v1582 = vpop.f32.mrf.mxu0
    %v1583 = vadd.f32 0.0, %v1582
    %1584 = vmatprep.mubr.f32.mxu0 0.0
    %1585 = vmatmul.mubr.f32.gmra.mxu0 %v1348
    %v1586 = vpop.f32.mrf.mxu0
    %v1587 = vadd.f32 0.0, %v1586
    %v1588 = vpop.f32.mrf.mxu0
    %v1589 = vadd.f32 0.0, %v1588
    %1590 = vmatprep.mubr.f32.mxu0 0.0
    %1591 = vmatmul.mubr.f32.gmra.mxu0 %v1349
    %v1592 = vpop.f32.mrf.mxu0
    %v1593 = vadd.f32 0.0, %v1592
    %v1594 = vpop.f32.mrf.mxu0
    %v1595 = vadd.f32 0.0, %v1594
    %1596 = vmatprep.mubr.f32.mxu0 0.0
    %1597 = vmatmul.mubr.f32.gmra.mxu0 %v1350
    %v1598 = vpop.f32.mrf.mxu0
    %v1599 = vadd.f32 0.0, %v1598
    %v1600 = vpop.f32.mrf.mxu0
    %v1601 = vadd.f32 0.0, %v1600
    %1602 = vmatprep.mubr.f32.mxu0 0.0
    %1603 = vmatmul.mubr.f32.gmra.mxu0 %v1351
    %v1604 = vpop.f32.mrf.mxu0
    %v1605 = vadd.f32 0.0, %v1604
    %v1606 = vpop.f32.mrf.mxu0
    %v1607 = vadd.f32 0.0, %v1606
    %1608 = vdwg.mxu0
    %s1609 = scalar_lea.vmem [#allocation2], 512
    %1610 = vst [vmem:[%s1609] sm:$0xff] %v1419
    %1611 = vst [vmem:[%s1609 + $0x8] sm:$0xff] %v1421
    %1612 = vst [vmem:[%s1609 + $0x10] sm:$0xff] %v1425
    %1613 = vst [vmem:[%s1609 + $0x18] sm:$0xff] %v1427
    %1614 = vst [vmem:[%s1609 + $0x20] sm:$0xff] %v1431
    %1615 = vst [vmem:[%s1609 + $0x28] sm:$0xff] %v1433
    %1616 = vst [vmem:[%s1609 + $0x30] sm:$0xff] %v1437
    %1617 = vst [vmem:[%s1609 + $0x38] sm:$0xff] %v1439
    %1618 = vst [vmem:[%s1609 + $0x40] sm:$0xff] %v1443
    %1619 = vst [vmem:[%s1609 + $0x48] sm:$0xff] %v1445
    %1620 = vst [vmem:[%s1609 + $0x50] sm:$0xff] %v1449
    %1621 = vst [vmem:[%s1609 + $0x58] sm:$0xff] %v1451
    %1622 = vst [vmem:[%s1609 + $0x60] sm:$0xff] %v1455
    %1623 = vst [vmem:[%s1609 + $0x68] sm:$0xff] %v1457
    %1624 = vst [vmem:[%s1609 + $0x70] sm:$0xff] %v1461
    %1625 = vst [vmem:[%s1609 + $0x78] sm:$0xff] %v1463
    %1626 = vst [vmem:[%s1609 + $0x80] sm:$0xff] %v1467
    %1627 = vst [vmem:[%s1609 + $0x88] sm:$0xff] %v1469
    %1628 = vst [vmem:[%s1609 + $0x90] sm:$0xff] %v1473
    %1629 = vst [vmem:[%s1609 + $0x98] sm:$0xff] %v1475
    %1630 = vst [vmem:[%s1609 + $0xa0] sm:$0xff] %v1479
    %1631 = vst [vmem:[%s1609 + $0xa8] sm:$0xff] %v1481
    %1632 = vst [vmem:[%s1609 + $0xb0] sm:$0xff] %v1485
    %1633 = vst [vmem:[%s1609 + $0xb8] sm:$0xff] %v1487
    %1634 = vst [vmem:[%s1609 + $0xc0] sm:$0xff] %v1491
    %1635 = vst [vmem:[%s1609 + $0xc8] sm:$0xff] %v1493
    %1636 = vst [vmem:[%s1609 + $0xd0] sm:$0xff] %v1497
    %1637 = vst [vmem:[%s1609 + $0xd8] sm:$0xff] %v1499
    %1638 = vst [vmem:[%s1609 + $0xe0] sm:$0xff] %v1503
    %1639 = vst [vmem:[%s1609 + $0xe8] sm:$0xff] %v1505
    %1640 = vst [vmem:[%s1609 + $0xf0] sm:$0xff] %v1509
    %1641 = vst [vmem:[%s1609 + $0xf8] sm:$0xff] %v1511
    %1642 = vst [vmem:[%s1609 + $0x100] sm:$0xff] %v1515
    %1643 = vst [vmem:[%s1609 + $0x108] sm:$0xff] %v1517
    %1644 = vst [vmem:[%s1609 + $0x110] sm:$0xff] %v1521
    %1645 = vst [vmem:[%s1609 + $0x118] sm:$0xff] %v1523
    %1646 = vst [vmem:[%s1609 + $0x120] sm:$0xff] %v1527
    %1647 = vst [vmem:[%s1609 + $0x128] sm:$0xff] %v1529
    %1648 = vst [vmem:[%s1609 + $0x130] sm:$0xff] %v1533
    %1649 = vst [vmem:[%s1609 + $0x138] sm:$0xff] %v1535
    %1650 = vst [vmem:[%s1609 + $0x140] sm:$0xff] %v1539
    %1651 = vst [vmem:[%s1609 + $0x148] sm:$0xff] %v1541
    %1652 = vst [vmem:[%s1609 + $0x150] sm:$0xff] %v1545
    %1653 = vst [vmem:[%s1609 + $0x158] sm:$0xff] %v1547
    %1654 = vst [vmem:[%s1609 + $0x160] sm:$0xff] %v1551
    %1655 = vst [vmem:[%s1609 + $0x168] sm:$0xff] %v1553
    %1656 = vst [vmem:[%s1609 + $0x170] sm:$0xff] %v1557
    %1657 = vst [vmem:[%s1609 + $0x178] sm:$0xff] %v1559
    %1658 = vst [vmem:[%s1609 + $0x180] sm:$0xff] %v1563
    %1659 = vst [vmem:[%s1609 + $0x188] sm:$0xff] %v1565
    %1660 = vst [vmem:[%s1609 + $0x190] sm:$0xff] %v1569
    %1661 = vst [vmem:[%s1609 + $0x198] sm:$0xff] %v1571
    %1662 = vst [vmem:[%s1609 + $0x1a0] sm:$0xff] %v1575
    %1663 = vst [vmem:[%s1609 + $0x1a8] sm:$0xff] %v1577
    %1664 = vst [vmem:[%s1609 + $0x1b0] sm:$0xff] %v1581
    %1665 = vst [vmem:[%s1609 + $0x1b8] sm:$0xff] %v1583
    %1666 = vst [vmem:[%s1609 + $0x1c0] sm:$0xff] %v1587
    %1667 = vst [vmem:[%s1609 + $0x1c8] sm:$0xff] %v1589
    %1668 = vst [vmem:[%s1609 + $0x1d0] sm:$0xff] %v1593
    %1669 = vst [vmem:[%s1609 + $0x1d8] sm:$0xff] %v1595
    %1670 = vst [vmem:[%s1609 + $0x1e0] sm:$0xff] %v1599
    %1671 = vst [vmem:[%s1609 + $0x1e8] sm:$0xff] %v1601
    %1672 = vst [vmem:[%s1609 + $0x1f0] sm:$0xff] %v1605
    %1673 = vst [vmem:[%s1609 + $0x1f8] sm:$0xff] %v1607
    // Predicated region
    $region14: #{basenet_forward.1} parent=1 // pred_check
      _
    $region15: #{basenet_forward.1} parent=1 // pred_check_branch
      %1675 = sbr.rel (0) target = $region17
    $region16: #{basenet_forward.1} parent=1 // pred_region
      _
    $region17: #{basenet_forward.1} parent=1 // pred_fallthru
      _
    // Predicated region
    $region18: #{basenet_forward.1} parent=1 // pred_check
      _
    $region19: #{basenet_forward.1} parent=1 // pred_check_branch
      %1677 = sbr.rel (0) target = $region21
    $region20: #{basenet_forward.1} parent=1 // pred_region
      %s1679 = ssub.s32 16384, 16384
      %1680 = vsyncadd [#allocation3], %s1679
      %s1681 = sshll.u32 [#allocation2], 4
      %s1682 = int_to_ptr.vmem [resolvable:$true] %s1681
      %1687 = dma.vmem_to_hbm [thread:$0]  %s1682, 16384, %s4, [#allocation3], 256, 256, 16
    $region21: #{basenet_forward.1} parent=1 // pred_fallthru
      _
    // Predicated region
    $region22: #{basenet_forward.1} parent=1 // pred_check
      _
    $region23: #{basenet_forward.1} parent=1 // pred_check_branch
      %1689 = sbr.rel (0) target = $region25
    $region24: #{basenet_forward.1} parent=1 // pred_region
      _
    $region25: #{basenet_forward.1} parent=1 // pred_fallthru
      _
    // Predicated region
    $region26: #{basenet_forward.1} parent=1 // pred_check
      _
    $region27: #{basenet_forward.1} parent=1 // pred_check_branch
      %1691 = sbr.rel (0) target = $region29
    $region28: #{basenet_forward.1} parent=1 // pred_region
      %1692 = dma.done [#allocation3], 16384
    $region29: #{basenet_forward.1} parent=1 // pred_fallthru
      _
    %1693 = vsyncpa [#allocation3], 1

</llo_original>
